<compile_context>
chip_gen: v6e
topology: v6e:2x2x1
jax: 0.10.0
libtpu: 0.0.40
codegen_flags: <defaults>
</compile_context>

<pallas_src>
import numpy as np
import jax
import jax.numpy as jnp
from jax.experimental import pallas as pl
from jax.experimental.pallas import tpu as pltpu


def make_transformer_block(embed_size, heads, seq_len, forward_expansion):
    head_dim = embed_size // heads
    hidden = forward_expansion * embed_size
    eps = 1e-5

    def build_kernel(block_n):
        R = block_n * seq_len   # rows per grid step in the (rows, E) slabs

        def kernel(q_ref, k_ref, v_ref,
                   wq_ref, wk_ref, wv_ref, wo_ref,
                   vec_ref, w1_ref, b1_ref, w2_ref,
                   out_ref):
            f32, bf16 = jnp.float32, jnp.bfloat16

            xq = q_ref[...]                       # (R, E) f32 — residual + attention input
            qb = xq.astype(bf16)
            kb = k_ref[...].astype(bf16)
            vb = v_ref[...].astype(bf16)
            wq = wq_ref[...]                      # (hd, hd) bf16, 1/sqrt(E) pre-folded
            wk = wk_ref[...]
            wv = wv_ref[...]

            # Per-head attention (heads is small & static -> fully unrolled).
            # All matmuls take bf16 operands and accumulate in f32 on the MXU.
            ctx_heads = []
            for h in range(heads):
                sl = slice(h * head_dim, (h + 1) * head_dim)
                qh = jnp.dot(qb[:, sl], wq, preferred_element_type=f32).astype(bf16)
                kh = jnp.dot(kb[:, sl], wk, preferred_element_type=f32).astype(bf16)
                vh = jnp.dot(vb[:, sl], wv, preferred_element_type=f32).astype(bf16)
                qh = qh.reshape(block_n, seq_len, head_dim)
                kh = kh.reshape(block_n, seq_len, head_dim)
                vh = vh.reshape(block_n, seq_len, head_dim)

                # Scores (scale already folded into Wq^T in the wrapper).
                s = jnp.einsum("bqd,bkd->bqk", qh, kh,
                               preferred_element_type=f32)           # (bn, S, S) f32
                m = jnp.max(s, axis=-1, keepdims=True)
                p = jnp.exp(s - m)                                   # unnormalized probs
                denom = jnp.sum(p, axis=-1, keepdims=True)           # (bn, S, 1)
                ctx = jnp.einsum("bqk,bkd->bqd", p.astype(bf16), vh,
                                 preferred_element_type=f32)         # (bn, S, hd) f32
                # Normalize AFTER P·V: touches (., S, hd) instead of (., S, S);
                # the reciprocal runs on the EUP slot.
                ctx = ctx * pl.reciprocal(denom, approx=True)
                ctx_heads.append(ctx.reshape(R, head_dim))

            # Fused fc_out: lane-concat the per-head contexts and run ONE matmul
            # with full contraction depth K = E (no per-head K=hd matmuls, no
            # partial-sum loop over heads).
            vec = vec_ref[...]                                       # (6, E) f32 rows
            ctx2d = jnp.concatenate(ctx_heads, axis=-1).astype(bf16)  # (R, E)
            att = jnp.dot(ctx2d, wo_ref[...], preferred_element_type=f32) + vec[0:1, :]

            # Residual + LayerNorm1 (f32).
            x = att + xq
            mu = jnp.mean(x, axis=-1, keepdims=True)
            var = jnp.mean((x - mu) ** 2, axis=-1, keepdims=True)
            x = (x - mu) * jax.lax.rsqrt(var + eps) * vec[1:2, :] + vec[2:3, :]
            # TODO(synk): nn.Dropout skipped (inference/eval semantics -> identity).

            # Feed-forward: Linear -> ReLU -> Linear (bf16 operands, f32 accumulate).
            h1 = jnp.dot(x.astype(bf16), w1_ref[...], preferred_element_type=f32) + b1_ref[...]
            h1 = jnp.maximum(h1, 0.0)
            ff = jnp.dot(h1.astype(bf16), w2_ref[...], preferred_element_type=f32) + vec[3:4, :]

            # Residual + LayerNorm2 (f32).
            y = ff + x
            mu2 = jnp.mean(y, axis=-1, keepdims=True)
            var2 = jnp.mean((y - mu2) ** 2, axis=-1, keepdims=True)
            out_ref[...] = (y - mu2) * jax.lax.rsqrt(var2 + eps) * vec[4:5, :] + vec[5:6, :]

        return kernel

    def forward(values, keys, query, params):
        N, S, E = query.shape
        assert S == seq_len and E == embed_size
        f32, bf16 = jnp.float32, jnp.bfloat16

        # ---- Generation-aware VMEM budget (v7x: 64 MiB physical; v5e/v6e: 128). ----
        try:
            vmem_cap = int(pltpu.get_tpu_info().vmem_capacity_bytes)
        except Exception:
            vmem_cap = 64 * 1024 * 1024           # conservative fallback (v7x-sized)
        vmem_limit = int(min(vmem_cap * 3 // 4, 96 * 1024 * 1024))

        # ---- block_n: batch elements per grid step. ----
        # Rough per-step footprint: quadratic scores/p tensors + (R, *) activations +
        # double-buffered input/output slabs.  Keep it well inside the VMEM limit,
        # keep >= 2 grid steps (so both v7x TensorCores get work), and target ~512
        # rows per step so the ~0.35 us per-step pipeline overhead is amortized.
        def step_bytes(bn):
            r = bn * S
            quad = bn * heads * S * S * 4 * 2
            acts = r * E * 4 * 8 + r * hidden * 4 * 2
            io = 2 * 2 * (3 * r * E * 4 + r * E * 4)
            return quad + acts + io

        cap = max(1, N // 2) if N >= 2 else 1
        cap = min(cap, max(1, 512 // S))
        block_n = 1
        for cand in range(1, min(N, cap) + 1):
            if N % cand == 0 and step_bytes(cand) <= vmem_limit // 2:
                block_n = cand
        grid = (N // block_n,)
        Rb = block_n * S

        # Lane-dense (rows, E) f32 activation slabs; query doubles as the residual.
        xq = query.reshape(N * S, E).astype(f32)
        xk = keys.reshape(N * S, E).astype(f32)
        xv = values.reshape(N * S, E).astype(f32)

        # Pre-transposed bf16 weights (x @ W.T convention -> pass W.T); the 1/sqrt(E)
        # attention scale is folded into Wq^T (f32 math, then a single bf16 cast).
        scale = 1.0 / float(np.sqrt(embed_size))
        wq_t = (params["Wq"].T * scale).astype(bf16)   # (hd, hd)
        wk_t = params["Wk"].T.astype(bf16)
        wv_t = params["Wv"].T.astype(bf16)
        wo_t = params["Wo"].T.astype(bf16)             # (E, E)
        w1_t = params["W1"].T.astype(bf16)             # (E, H)
        w2_t = params["W2"].T.astype(bf16)             # (H, E)

        # Pack the six E-wide bias / LayerNorm vectors into one slab (fewer DMAs).
        vecE = jnp.stack([params["bo"], params["g1"], params["be1"],
                          params["b2"], params["g2"], params["be2"]]).astype(f32)  # (6, E)
        b1 = params["b1"].reshape(1, hidden).astype(f32)

        slab = pl.BlockSpec((Rb, E), lambda n: (n, 0))
        full2d = lambda shp: pl.BlockSpec(shp, lambda n: (0, 0))

        out = pl.pallas_call(
            build_kernel(block_n),
            out_shape=jax.ShapeDtypeStruct((N * S, E), f32),
            grid=grid,
            in_specs=[
                slab, slab, slab,                      # xq (residual + attn), xk, xv
                full2d((head_dim, head_dim)),          # Wq^T (pre-scaled)
                full2d((head_dim, head_dim)),          # Wk^T
                full2d((head_dim, head_dim)),          # Wv^T
                full2d((E, E)),                        # Wo^T
                full2d((6, E)),                        # [bo, g1, be1, b2, g2, be2]
                full2d((E, hidden)),                   # W1^T
                full2d((1, hidden)),                   # b1
                full2d((hidden, E)),                   # W2^T
            ],
            out_specs=pl.BlockSpec((Rb, E), lambda n: (n, 0)),
            compiler_params=pltpu.CompilerParams(
                dimension_semantics=("parallel",),
                vmem_limit_bytes=vmem_limit),
        )(xq, xk, xv, wq_t, wk_t, wv_t, wo_t, vecE, w1_t, b1, w2_t)

        return out.reshape(N, S, E)

    return jax.jit(forward)


def reference_forward(values, keys, query, params, embed_size, heads):
    """Pure-JAX (f32) mirror of the PyTorch TransformerBlock forward (eval mode)."""
    N, S, E = query.shape
    hd = embed_size // heads
    eps = 1e-5

    def ln(x, g, b):
        mu = jnp.mean(x, axis=-1, keepdims=True)
        var = jnp.mean((x - mu) ** 2, axis=-1, keepdims=True)
        return (x - mu) / jnp.sqrt(var + eps) * g + b

    v = values.reshape(N, S, heads, hd)
    k = keys.reshape(N, S, heads, hd)
    q = query.reshape(N, S, heads, hd)
    v = jnp.einsum("nshd,ed->nshe", v, params["Wv"])
    k = jnp.einsum("nshd,ed->nshe", k, params["Wk"])
    q = jnp.einsum("nshd,ed->nshe", q, params["Wq"])
    e = jnp.einsum("nqhd,nkhd->nhqk", q, k)
    attn = jax.nn.softmax(e / (embed_size ** 0.5), axis=3)
    out = jnp.einsum("nhql,nlhd->nqhd", attn, v).reshape(N, S, heads * hd)
    out = out @ params["Wo"].T + params["bo"]
    x = ln(out + query, params["g1"], params["be1"])
    ff = jnp.maximum(x @ params["W1"].T + params["b1"], 0.0) @ params["W2"].T + params["b2"]
    return ln(ff + x, params["g2"], params["be2"])


if __name__ == "__main__":
    N, S, E, HEADS, FWD_EXP = 2, 8, 32, 4, 2
    HD = E // HEADS
    H = FWD_EXP * E

    key = jax.random.PRNGKey(0)
    ks = jax.random.split(key, 12)
    params = {
        "Wq": jax.random.normal(ks[0], (HD, HD), jnp.float32) * 0.2,
        "Wk": jax.random.normal(ks[1], (HD, HD), jnp.float32) * 0.2,
        "Wv": jax.random.normal(ks[2], (HD, HD), jnp.float32) * 0.2,
        "Wo": jax.random.normal(ks[3], (E, E), jnp.float32) * 0.1,
        "bo": jax.random.normal(ks[4], (E,), jnp.float32) * 0.05,
        "g1": jnp.ones((E,), jnp.float32),
        "be1": jnp.zeros((E,), jnp.float32),
        "W1": jax.random.normal(ks[5], (H, E), jnp.float32) * 0.1,
        "b1": jax.random.normal(ks[6], (H,), jnp.float32) * 0.05,
        "W2": jax.random.normal(ks[7], (E, H), jnp.float32) * 0.1,
        "b2": jax.random.normal(ks[8], (E,), jnp.float32) * 0.05,
        "g2": jnp.ones((E,), jnp.float32),
        "be2": jnp.zeros((E,), jnp.float32),
    }

    values = jax.random.normal(ks[9], (N, S, E), jnp.float32)
    keys_in = jax.random.normal(ks[10], (N, S, E), jnp.float32)
    query = jax.random.normal(ks[11], (N, S, E), jnp.float32)

    fwd = make_transformer_block(E, HEADS, S, FWD_EXP)
    out = fwd(values, keys_in, query, params)
    out = jax.block_until_ready(out)

    ref = reference_forward(values, keys_in, query, params, E, HEADS)
    np.testing.assert_allclose(np.asarray(out), np.asarray(ref), rtol=2e-2, atol=2e-2)

    print("KERNEL_OK")
</pallas_src>

<mosaic_0001>
module attributes {stable_mosaic.version = 11 : i64} {
  func.func @kernel(%arg0: i32, %arg1: memref<8x32xf32, #tpu.memory_space<vmem>>, %arg2: memref<8x32xf32, #tpu.memory_space<vmem>>, %arg3: memref<8x32xf32, #tpu.memory_space<vmem>>, %arg4: memref<8x8xbf16, #tpu.memory_space<vmem>>, %arg5: memref<8x8xbf16, #tpu.memory_space<vmem>>, %arg6: memref<8x8xbf16, #tpu.memory_space<vmem>>, %arg7: memref<32x32xbf16, #tpu.memory_space<vmem>>, %arg8: memref<6x32xf32, #tpu.memory_space<vmem>>, %arg9: memref<32x64xbf16, #tpu.memory_space<vmem>>, %arg10: memref<1x64xf32, #tpu.memory_space<vmem>>, %arg11: memref<64x32xbf16, #tpu.memory_space<vmem>>, %arg12: memref<8x32xf32, #tpu.memory_space<vmem>>) attributes {dimension_semantics = [#tpu.dimension_semantics<parallel>], iteration_bounds = array<i64: 2>, scalar_prefetch = 0 : i64, scratch_operands = 0 : i64, tpu.core_type = #tpu.core_type<tc>, window_params = [{transform_indices = @transform_0, window_bounds = array<i64: 8, 32>}, {transform_indices = @transform_1, window_bounds = array<i64: 8, 32>}, {transform_indices = @transform_2, window_bounds = array<i64: 8, 32>}, {pipeline_mode = #tpu.pipeline_mode<synchronous>, transform_indices = @transform_3, window_bounds = array<i64: 8, 8>}, {pipeline_mode = #tpu.pipeline_mode<synchronous>, transform_indices = @transform_4, window_bounds = array<i64: 8, 8>}, {pipeline_mode = #tpu.pipeline_mode<synchronous>, transform_indices = @transform_5, window_bounds = array<i64: 8, 8>}, {pipeline_mode = #tpu.pipeline_mode<synchronous>, transform_indices = @transform_6, window_bounds = array<i64: 32, 32>}, {pipeline_mode = #tpu.pipeline_mode<synchronous>, transform_indices = @transform_7, window_bounds = array<i64: 6, 32>}, {pipeline_mode = #tpu.pipeline_mode<synchronous>, transform_indices = @transform_8, window_bounds = array<i64: 32, 64>}, {pipeline_mode = #tpu.pipeline_mode<synchronous>, transform_indices = @transform_9, window_bounds = array<i64: 1, 64>}, {pipeline_mode = #tpu.pipeline_mode<synchronous>, transform_indices = @transform_10, window_bounds = array<i64: 64, 32>}, {transform_indices = @transform_11, window_bounds = array<i64: 8, 32>}]} {
    %c0 = arith.constant 0 : index
    %c0_0 = arith.constant 0 : index
    %0 = vector.load %arg1[%c0, %c0_0] : memref<8x32xf32, #tpu.memory_space<vmem>>, vector<8x32xf32>
    %1 = arith.truncf %0 : vector<8x32xf32> to vector<8x32xbf16>
    %c0_1 = arith.constant 0 : index
    %c0_2 = arith.constant 0 : index
    %2 = vector.load %arg2[%c0_1, %c0_2] : memref<8x32xf32, #tpu.memory_space<vmem>>, vector<8x32xf32>
    %3 = arith.truncf %2 : vector<8x32xf32> to vector<8x32xbf16>
    %c0_3 = arith.constant 0 : index
    %c0_4 = arith.constant 0 : index
    %4 = vector.load %arg3[%c0_3, %c0_4] : memref<8x32xf32, #tpu.memory_space<vmem>>, vector<8x32xf32>
    %5 = arith.truncf %4 : vector<8x32xf32> to vector<8x32xbf16>
    %c0_5 = arith.constant 0 : index
    %c0_6 = arith.constant 0 : index
    %6 = vector.load %arg4[%c0_5, %c0_6] : memref<8x8xbf16, #tpu.memory_space<vmem>>, vector<8x8xbf16>
    %c0_7 = arith.constant 0 : index
    %c0_8 = arith.constant 0 : index
    %7 = vector.load %arg5[%c0_7, %c0_8] : memref<8x8xbf16, #tpu.memory_space<vmem>>, vector<8x8xbf16>
    %c0_9 = arith.constant 0 : index
    %c0_10 = arith.constant 0 : index
    %8 = vector.load %arg6[%c0_9, %c0_10] : memref<8x8xbf16, #tpu.memory_space<vmem>>, vector<8x8xbf16>
    %9 = vector.extract_strided_slice %1 {offsets = [0, 0], sizes = [8, 8], strides = [1, 1]} : vector<8x32xbf16> to vector<8x8xbf16>
    %cst = arith.constant dense<0.000000e+00> : vector<8x8xf32>
    %10 = tpu.matmul %9, %6, %cst {dimension_numbers = #tpu.dot_dimension_numbers<[1], [0], [0], [1], [0, 0, 1, 1], [], []>} : vector<8x8xbf16>, vector<8x8xbf16>, vector<8x8xf32> -> vector<8x8xf32>
    %11 = arith.truncf %10 : vector<8x8xf32> to vector<8x8xbf16>
    %12 = vector.extract_strided_slice %3 {offsets = [0, 0], sizes = [8, 8], strides = [1, 1]} : vector<8x32xbf16> to vector<8x8xbf16>
    %cst_11 = arith.constant dense<0.000000e+00> : vector<8x8xf32>
    %13 = tpu.matmul %12, %7, %cst_11 {dimension_numbers = #tpu.dot_dimension_numbers<[1], [0], [0], [1], [0, 0, 1, 1], [], []>} : vector<8x8xbf16>, vector<8x8xbf16>, vector<8x8xf32> -> vector<8x8xf32>
    %14 = arith.truncf %13 : vector<8x8xf32> to vector<8x8xbf16>
    %15 = vector.extract_strided_slice %5 {offsets = [0, 0], sizes = [8, 8], strides = [1, 1]} : vector<8x32xbf16> to vector<8x8xbf16>
    %cst_12 = arith.constant dense<0.000000e+00> : vector<8x8xf32>
    %16 = tpu.matmul %15, %8, %cst_12 {dimension_numbers = #tpu.dot_dimension_numbers<[1], [0], [0], [1], [0, 0, 1, 1], [], []>} : vector<8x8xbf16>, vector<8x8xbf16>, vector<8x8xf32> -> vector<8x8xf32>
    %17 = arith.truncf %16 : vector<8x8xf32> to vector<8x8xbf16>
    %18 = vector.shape_cast %11 : vector<8x8xbf16> to vector<1x8x8xbf16>
    %19 = vector.shape_cast %14 : vector<8x8xbf16> to vector<1x8x8xbf16>
    %20 = vector.shape_cast %17 : vector<8x8xbf16> to vector<1x8x8xbf16>
    "tpu.trace_start"() <{level = 10 : i32, message = "bqd,bkd->bqk"}> : () -> ()
    %cst_13 = arith.constant dense<0.000000e+00> : vector<1x8x8xf32>
    %21 = tpu.matmul %18, %19, %cst_13 {dimension_numbers = #tpu.dot_dimension_numbers<[2], [2], [1], [1], [0, 0, 0, 1, 1, 1], [0], [0]>} : vector<1x8x8xbf16>, vector<1x8x8xbf16>, vector<1x8x8xf32> -> vector<1x8x8xf32>
    "tpu.trace_stop"() : () -> ()
    %cst_14 = arith.constant dense<0xFF800000> : vector<1x8xf32>
    %22 = vector.multi_reduction <maximumf>, %21, %cst_14 [2] : vector<1x8x8xf32> to vector<1x8xf32>
    %23 = vector.shape_cast %22 : vector<1x8xf32> to vector<1x8x1xf32>
    %24 = vector.broadcast %23 : vector<1x8x1xf32> to vector<1x8x8xf32>
    %25 = arith.subf %21, %24 : vector<1x8x8xf32>
    %26 = math.exp %25 : vector<1x8x8xf32>
    %cst_15 = arith.constant dense<0.000000e+00> : vector<1x8xf32>
    %27 = vector.multi_reduction <add>, %26, %cst_15 [2] : vector<1x8x8xf32> to vector<1x8xf32>
    %28 = vector.shape_cast %27 : vector<1x8xf32> to vector<1x8x1xf32>
    %29 = arith.truncf %26 : vector<1x8x8xf32> to vector<1x8x8xbf16>
    "tpu.trace_start"() <{level = 10 : i32, message = "bqk,bkd->bqd"}> : () -> ()
    %cst_16 = arith.constant dense<0.000000e+00> : vector<1x8x8xf32>
    %30 = tpu.matmul %29, %20, %cst_16 {dimension_numbers = #tpu.dot_dimension_numbers<[2], [1], [1], [2], [0, 0, 0, 1, 1, 2], [0], [0]>} : vector<1x8x8xbf16>, vector<1x8x8xbf16>, vector<1x8x8xf32> -> vector<1x8x8xf32>
    "tpu.trace_stop"() : () -> ()
    %31 = tpu.reciprocal %28 {approx = true} : vector<1x8x1xf32> -> vector<1x8x1xf32>
    %32 = vector.broadcast %31 : vector<1x8x1xf32> to vector<1x8x8xf32>
    %33 = arith.mulf %30, %32 : vector<1x8x8xf32>
    %34 = vector.shape_cast %33 : vector<1x8x8xf32> to vector<8x8xf32>
    %35 = vector.extract_strided_slice %1 {offsets = [0, 8], sizes = [8, 8], strides = [1, 1]} : vector<8x32xbf16> to vector<8x8xbf16>
    %cst_17 = arith.constant dense<0.000000e+00> : vector<8x8xf32>
    %36 = tpu.matmul %35, %6, %cst_17 {dimension_numbers = #tpu.dot_dimension_numbers<[1], [0], [0], [1], [0, 0, 1, 1], [], []>} : vector<8x8xbf16>, vector<8x8xbf16>, vector<8x8xf32> -> vector<8x8xf32>
    %37 = arith.truncf %36 : vector<8x8xf32> to vector<8x8xbf16>
    %38 = vector.extract_strided_slice %3 {offsets = [0, 8], sizes = [8, 8], strides = [1, 1]} : vector<8x32xbf16> to vector<8x8xbf16>
    %cst_18 = arith.constant dense<0.000000e+00> : vector<8x8xf32>
    %39 = tpu.matmul %38, %7, %cst_18 {dimension_numbers = #tpu.dot_dimension_numbers<[1], [0], [0], [1], [0, 0, 1, 1], [], []>} : vector<8x8xbf16>, vector<8x8xbf16>, vector<8x8xf32> -> vector<8x8xf32>
    %40 = arith.truncf %39 : vector<8x8xf32> to vector<8x8xbf16>
    %41 = vector.extract_strided_slice %5 {offsets = [0, 8], sizes = [8, 8], strides = [1, 1]} : vector<8x32xbf16> to vector<8x8xbf16>
    %cst_19 = arith.constant dense<0.000000e+00> : vector<8x8xf32>
    %42 = tpu.matmul %41, %8, %cst_19 {dimension_numbers = #tpu.dot_dimension_numbers<[1], [0], [0], [1], [0, 0, 1, 1], [], []>} : vector<8x8xbf16>, vector<8x8xbf16>, vector<8x8xf32> -> vector<8x8xf32>
    %43 = arith.truncf %42 : vector<8x8xf32> to vector<8x8xbf16>
    %44 = vector.shape_cast %37 : vector<8x8xbf16> to vector<1x8x8xbf16>
    %45 = vector.shape_cast %40 : vector<8x8xbf16> to vector<1x8x8xbf16>
    %46 = vector.shape_cast %43 : vector<8x8xbf16> to vector<1x8x8xbf16>
    "tpu.trace_start"() <{level = 10 : i32, message = "bqd,bkd->bqk"}> : () -> ()
    %cst_20 = arith.constant dense<0.000000e+00> : vector<1x8x8xf32>
    %47 = tpu.matmul %44, %45, %cst_20 {dimension_numbers = #tpu.dot_dimension_numbers<[2], [2], [1], [1], [0, 0, 0, 1, 1, 1], [0], [0]>} : vector<1x8x8xbf16>, vector<1x8x8xbf16>, vector<1x8x8xf32> -> vector<1x8x8xf32>
    "tpu.trace_stop"() : () -> ()
    %cst_21 = arith.constant dense<0xFF800000> : vector<1x8xf32>
    %48 = vector.multi_reduction <maximumf>, %47, %cst_21 [2] : vector<1x8x8xf32> to vector<1x8xf32>
    %49 = vector.shape_cast %48 : vector<1x8xf32> to vector<1x8x1xf32>
    %50 = vector.broadcast %49 : vector<1x8x1xf32> to vector<1x8x8xf32>
    %51 = arith.subf %47, %50 : vector<1x8x8xf32>
    %52 = math.exp %51 : vector<1x8x8xf32>
    %cst_22 = arith.constant dense<0.000000e+00> : vector<1x8xf32>
    %53 = vector.multi_reduction <add>, %52, %cst_22 [2] : vector<1x8x8xf32> to vector<1x8xf32>
    %54 = vector.shape_cast %53 : vector<1x8xf32> to vector<1x8x1xf32>
    %55 = arith.truncf %52 : vector<1x8x8xf32> to vector<1x8x8xbf16>
    "tpu.trace_start"() <{level = 10 : i32, message = "bqk,bkd->bqd"}> : () -> ()
    %cst_23 = arith.constant dense<0.000000e+00> : vector<1x8x8xf32>
    %56 = tpu.matmul %55, %46, %cst_23 {dimension_numbers = #tpu.dot_dimension_numbers<[2], [1], [1], [2], [0, 0, 0, 1, 1, 2], [0], [0]>} : vector<1x8x8xbf16>, vector<1x8x8xbf16>, vector<1x8x8xf32> -> vector<1x8x8xf32>
    "tpu.trace_stop"() : () -> ()
    %57 = tpu.reciprocal %54 {approx = true} : vector<1x8x1xf32> -> vector<1x8x1xf32>
    %58 = vector.broadcast %57 : vector<1x8x1xf32> to vector<1x8x8xf32>
    %59 = arith.mulf %56, %58 : vector<1x8x8xf32>
    %60 = vector.shape_cast %59 : vector<1x8x8xf32> to vector<8x8xf32>
    %61 = vector.extract_strided_slice %1 {offsets = [0, 16], sizes = [8, 8], strides = [1, 1]} : vector<8x32xbf16> to vector<8x8xbf16>
    %cst_24 = arith.constant dense<0.000000e+00> : vector<8x8xf32>
    %62 = tpu.matmul %61, %6, %cst_24 {dimension_numbers = #tpu.dot_dimension_numbers<[1], [0], [0], [1], [0, 0, 1, 1], [], []>} : vector<8x8xbf16>, vector<8x8xbf16>, vector<8x8xf32> -> vector<8x8xf32>
    %63 = arith.truncf %62 : vector<8x8xf32> to vector<8x8xbf16>
    %64 = vector.extract_strided_slice %3 {offsets = [0, 16], sizes = [8, 8], strides = [1, 1]} : vector<8x32xbf16> to vector<8x8xbf16>
    %cst_25 = arith.constant dense<0.000000e+00> : vector<8x8xf32>
    %65 = tpu.matmul %64, %7, %cst_25 {dimension_numbers = #tpu.dot_dimension_numbers<[1], [0], [0], [1], [0, 0, 1, 1], [], []>} : vector<8x8xbf16>, vector<8x8xbf16>, vector<8x8xf32> -> vector<8x8xf32>
    %66 = arith.truncf %65 : vector<8x8xf32> to vector<8x8xbf16>
    %67 = vector.extract_strided_slice %5 {offsets = [0, 16], sizes = [8, 8], strides = [1, 1]} : vector<8x32xbf16> to vector<8x8xbf16>
    %cst_26 = arith.constant dense<0.000000e+00> : vector<8x8xf32>
    %68 = tpu.matmul %67, %8, %cst_26 {dimension_numbers = #tpu.dot_dimension_numbers<[1], [0], [0], [1], [0, 0, 1, 1], [], []>} : vector<8x8xbf16>, vector<8x8xbf16>, vector<8x8xf32> -> vector<8x8xf32>
    %69 = arith.truncf %68 : vector<8x8xf32> to vector<8x8xbf16>
    %70 = vector.shape_cast %63 : vector<8x8xbf16> to vector<1x8x8xbf16>
    %71 = vector.shape_cast %66 : vector<8x8xbf16> to vector<1x8x8xbf16>
    %72 = vector.shape_cast %69 : vector<8x8xbf16> to vector<1x8x8xbf16>
    "tpu.trace_start"() <{level = 10 : i32, message = "bqd,bkd->bqk"}> : () -> ()
    %cst_27 = arith.constant dense<0.000000e+00> : vector<1x8x8xf32>
    %73 = tpu.matmul %70, %71, %cst_27 {dimension_numbers = #tpu.dot_dimension_numbers<[2], [2], [1], [1], [0, 0, 0, 1, 1, 1], [0], [0]>} : vector<1x8x8xbf16>, vector<1x8x8xbf16>, vector<1x8x8xf32> -> vector<1x8x8xf32>
    "tpu.trace_stop"() : () -> ()
    %cst_28 = arith.constant dense<0xFF800000> : vector<1x8xf32>
    %74 = vector.multi_reduction <maximumf>, %73, %cst_28 [2] : vector<1x8x8xf32> to vector<1x8xf32>
    %75 = vector.shape_cast %74 : vector<1x8xf32> to vector<1x8x1xf32>
    %76 = vector.broadcast %75 : vector<1x8x1xf32> to vector<1x8x8xf32>
    %77 = arith.subf %73, %76 : vector<1x8x8xf32>
    %78 = math.exp %77 : vector<1x8x8xf32>
    %cst_29 = arith.constant dense<0.000000e+00> : vector<1x8xf32>
    %79 = vector.multi_reduction <add>, %78, %cst_29 [2] : vector<1x8x8xf32> to vector<1x8xf32>
    %80 = vector.shape_cast %79 : vector<1x8xf32> to vector<1x8x1xf32>
    %81 = arith.truncf %78 : vector<1x8x8xf32> to vector<1x8x8xbf16>
    "tpu.trace_start"() <{level = 10 : i32, message = "bqk,bkd->bqd"}> : () -> ()
    %cst_30 = arith.constant dense<0.000000e+00> : vector<1x8x8xf32>
    %82 = tpu.matmul %81, %72, %cst_30 {dimension_numbers = #tpu.dot_dimension_numbers<[2], [1], [1], [2], [0, 0, 0, 1, 1, 2], [0], [0]>} : vector<1x8x8xbf16>, vector<1x8x8xbf16>, vector<1x8x8xf32> -> vector<1x8x8xf32>
    "tpu.trace_stop"() : () -> ()
    %83 = tpu.reciprocal %80 {approx = true} : vector<1x8x1xf32> -> vector<1x8x1xf32>
    %84 = vector.broadcast %83 : vector<1x8x1xf32> to vector<1x8x8xf32>
    %85 = arith.mulf %82, %84 : vector<1x8x8xf32>
    %86 = vector.shape_cast %85 : vector<1x8x8xf32> to vector<8x8xf32>
    %87 = vector.extract_strided_slice %1 {offsets = [0, 24], sizes = [8, 8], strides = [1, 1]} : vector<8x32xbf16> to vector<8x8xbf16>
    %cst_31 = arith.constant dense<0.000000e+00> : vector<8x8xf32>
    %88 = tpu.matmul %87, %6, %cst_31 {dimension_numbers = #tpu.dot_dimension_numbers<[1], [0], [0], [1], [0, 0, 1, 1], [], []>} : vector<8x8xbf16>, vector<8x8xbf16>, vector<8x8xf32> -> vector<8x8xf32>
    %89 = arith.truncf %88 : vector<8x8xf32> to vector<8x8xbf16>
    %90 = vector.extract_strided_slice %3 {offsets = [0, 24], sizes = [8, 8], strides = [1, 1]} : vector<8x32xbf16> to vector<8x8xbf16>
    %cst_32 = arith.constant dense<0.000000e+00> : vector<8x8xf32>
    %91 = tpu.matmul %90, %7, %cst_32 {dimension_numbers = #tpu.dot_dimension_numbers<[1], [0], [0], [1], [0, 0, 1, 1], [], []>} : vector<8x8xbf16>, vector<8x8xbf16>, vector<8x8xf32> -> vector<8x8xf32>
    %92 = arith.truncf %91 : vector<8x8xf32> to vector<8x8xbf16>
    %93 = vector.extract_strided_slice %5 {offsets = [0, 24], sizes = [8, 8], strides = [1, 1]} : vector<8x32xbf16> to vector<8x8xbf16>
    %cst_33 = arith.constant dense<0.000000e+00> : vector<8x8xf32>
    %94 = tpu.matmul %93, %8, %cst_33 {dimension_numbers = #tpu.dot_dimension_numbers<[1], [0], [0], [1], [0, 0, 1, 1], [], []>} : vector<8x8xbf16>, vector<8x8xbf16>, vector<8x8xf32> -> vector<8x8xf32>
    %95 = arith.truncf %94 : vector<8x8xf32> to vector<8x8xbf16>
    %96 = vector.shape_cast %89 : vector<8x8xbf16> to vector<1x8x8xbf16>
    %97 = vector.shape_cast %92 : vector<8x8xbf16> to vector<1x8x8xbf16>
    %98 = vector.shape_cast %95 : vector<8x8xbf16> to vector<1x8x8xbf16>
    "tpu.trace_start"() <{level = 10 : i32, message = "bqd,bkd->bqk"}> : () -> ()
    %cst_34 = arith.constant dense<0.000000e+00> : vector<1x8x8xf32>
    %99 = tpu.matmul %96, %97, %cst_34 {dimension_numbers = #tpu.dot_dimension_numbers<[2], [2], [1], [1], [0, 0, 0, 1, 1, 1], [0], [0]>} : vector<1x8x8xbf16>, vector<1x8x8xbf16>, vector<1x8x8xf32> -> vector<1x8x8xf32>
    "tpu.trace_stop"() : () -> ()
    %cst_35 = arith.constant dense<0xFF800000> : vector<1x8xf32>
    %100 = vector.multi_reduction <maximumf>, %99, %cst_35 [2] : vector<1x8x8xf32> to vector<1x8xf32>
    %101 = vector.shape_cast %100 : vector<1x8xf32> to vector<1x8x1xf32>
    %102 = vector.broadcast %101 : vector<1x8x1xf32> to vector<1x8x8xf32>
    %103 = arith.subf %99, %102 : vector<1x8x8xf32>
    %104 = math.exp %103 : vector<1x8x8xf32>
    %cst_36 = arith.constant dense<0.000000e+00> : vector<1x8xf32>
    %105 = vector.multi_reduction <add>, %104, %cst_36 [2] : vector<1x8x8xf32> to vector<1x8xf32>
    %106 = vector.shape_cast %105 : vector<1x8xf32> to vector<1x8x1xf32>
    %107 = arith.truncf %104 : vector<1x8x8xf32> to vector<1x8x8xbf16>
    "tpu.trace_start"() <{level = 10 : i32, message = "bqk,bkd->bqd"}> : () -> ()
    %cst_37 = arith.constant dense<0.000000e+00> : vector<1x8x8xf32>
    %108 = tpu.matmul %107, %98, %cst_37 {dimension_numbers = #tpu.dot_dimension_numbers<[2], [1], [1], [2], [0, 0, 0, 1, 1, 2], [0], [0]>} : vector<1x8x8xbf16>, vector<1x8x8xbf16>, vector<1x8x8xf32> -> vector<1x8x8xf32>
    "tpu.trace_stop"() : () -> ()
    %109 = tpu.reciprocal %106 {approx = true} : vector<1x8x1xf32> -> vector<1x8x1xf32>
    %110 = vector.broadcast %109 : vector<1x8x1xf32> to vector<1x8x8xf32>
    %111 = arith.mulf %108, %110 : vector<1x8x8xf32>
    %112 = vector.shape_cast %111 : vector<1x8x8xf32> to vector<8x8xf32>
    %c0_38 = arith.constant 0 : index
    %c0_39 = arith.constant 0 : index
    %113 = vector.load %arg8[%c0_38, %c0_39] : memref<6x32xf32, #tpu.memory_space<vmem>>, vector<6x32xf32>
    %114 = tpu.concatenate %34, %60, %86, %112 in 1 : vector<8x8xf32>, vector<8x8xf32>, vector<8x8xf32>, vector<8x8xf32> -> vector<8x32xf32>
    %115 = arith.truncf %114 : vector<8x32xf32> to vector<8x32xbf16>
    %c0_40 = arith.constant 0 : index
    %c0_41 = arith.constant 0 : index
    %116 = vector.load %arg7[%c0_40, %c0_41] : memref<32x32xbf16, #tpu.memory_space<vmem>>, vector<32x32xbf16>
    %cst_42 = arith.constant dense<0.000000e+00> : vector<8x32xf32>
    %117 = tpu.matmul %115, %116, %cst_42 {dimension_numbers = #tpu.dot_dimension_numbers<[1], [0], [0], [1], [0, 0, 1, 1], [], []>} : vector<8x32xbf16>, vector<32x32xbf16>, vector<8x32xf32> -> vector<8x32xf32>
    %118 = vector.extract_strided_slice %113 {offsets = [0, 0], sizes = [1, 32], strides = [1, 1]} : vector<6x32xf32> to vector<1x32xf32>
    %119 = vector.broadcast %118 : vector<1x32xf32> to vector<8x32xf32>
    %120 = arith.addf %117, %119 : vector<8x32xf32>
    %121 = arith.addf %120, %0 : vector<8x32xf32>
    %cst_43 = arith.constant dense<0.000000e+00> : vector<8xf32>
    %122 = vector.multi_reduction <add>, %121, %cst_43 [1] : vector<8x32xf32> to vector<8xf32>
    %123 = vector.shape_cast %122 : vector<8xf32> to vector<8x1xf32>
    %cst_44 = arith.constant 3.200000e+01 : f32
    %124 = vector.broadcast %cst_44 : f32 to vector<8x1xf32>
    %125 = arith.divf %123, %124 : vector<8x1xf32>
    %126 = vector.broadcast %125 : vector<8x1xf32> to vector<8x32xf32>
    %127 = arith.subf %121, %126 : vector<8x32xf32>
    %128 = arith.mulf %127, %127 : vector<8x32xf32>
    %cst_45 = arith.constant dense<0.000000e+00> : vector<8xf32>
    %129 = vector.multi_reduction <add>, %128, %cst_45 [1] : vector<8x32xf32> to vector<8xf32>
    %130 = vector.shape_cast %129 : vector<8xf32> to vector<8x1xf32>
    %cst_46 = arith.constant 3.200000e+01 : f32
    %131 = vector.broadcast %cst_46 : f32 to vector<8x1xf32>
    %132 = arith.divf %130, %131 : vector<8x1xf32>
    %133 = vector.broadcast %125 : vector<8x1xf32> to vector<8x32xf32>
    %134 = arith.subf %121, %133 : vector<8x32xf32>
    %cst_47 = arith.constant 9.99999974E-6 : f32
    %135 = vector.broadcast %cst_47 : f32 to vector<8x1xf32>
    %136 = arith.addf %132, %135 : vector<8x1xf32>
    %137 = math.rsqrt %136 : vector<8x1xf32>
    %138 = vector.broadcast %137 : vector<8x1xf32> to vector<8x32xf32>
    %139 = arith.mulf %134, %138 : vector<8x32xf32>
    %140 = vector.extract_strided_slice %113 {offsets = [1, 0], sizes = [1, 32], strides = [1, 1]} : vector<6x32xf32> to vector<1x32xf32>
    %141 = vector.broadcast %140 : vector<1x32xf32> to vector<8x32xf32>
    %142 = arith.mulf %139, %141 : vector<8x32xf32>
    %143 = vector.extract_strided_slice %113 {offsets = [2, 0], sizes = [1, 32], strides = [1, 1]} : vector<6x32xf32> to vector<1x32xf32>
    %144 = vector.broadcast %143 : vector<1x32xf32> to vector<8x32xf32>
    %145 = arith.addf %142, %144 : vector<8x32xf32>
    %146 = arith.truncf %145 : vector<8x32xf32> to vector<8x32xbf16>
    %c0_48 = arith.constant 0 : index
    %c0_49 = arith.constant 0 : index
    %147 = vector.load %arg9[%c0_48, %c0_49] : memref<32x64xbf16, #tpu.memory_space<vmem>>, vector<32x64xbf16>
    %cst_50 = arith.constant dense<0.000000e+00> : vector<8x64xf32>
    %148 = tpu.matmul %146, %147, %cst_50 {dimension_numbers = #tpu.dot_dimension_numbers<[1], [0], [0], [1], [0, 0, 1, 1], [], []>} : vector<8x32xbf16>, vector<32x64xbf16>, vector<8x64xf32> -> vector<8x64xf32>
    %c0_51 = arith.constant 0 : index
    %c0_52 = arith.constant 0 : index
    %149 = vector.load %arg10[%c0_51, %c0_52] : memref<1x64xf32, #tpu.memory_space<vmem>>, vector<1x64xf32>
    %150 = vector.broadcast %149 : vector<1x64xf32> to vector<8x64xf32>
    %151 = arith.addf %148, %150 : vector<8x64xf32>
    %cst_53 = arith.constant 0.000000e+00 : f32
    %152 = vector.broadcast %cst_53 : f32 to vector<8x64xf32>
    %153 = arith.maximumf %151, %152 : vector<8x64xf32>
    %154 = arith.truncf %153 : vector<8x64xf32> to vector<8x64xbf16>
    %c0_54 = arith.constant 0 : index
    %c0_55 = arith.constant 0 : index
    %155 = vector.load %arg11[%c0_54, %c0_55] : memref<64x32xbf16, #tpu.memory_space<vmem>>, vector<64x32xbf16>
    %cst_56 = arith.constant dense<0.000000e+00> : vector<8x32xf32>
    %156 = tpu.matmul %154, %155, %cst_56 {dimension_numbers = #tpu.dot_dimension_numbers<[1], [0], [0], [1], [0, 0, 1, 1], [], []>} : vector<8x64xbf16>, vector<64x32xbf16>, vector<8x32xf32> -> vector<8x32xf32>
    %157 = vector.extract_strided_slice %113 {offsets = [3, 0], sizes = [1, 32], strides = [1, 1]} : vector<6x32xf32> to vector<1x32xf32>
    %158 = vector.broadcast %157 : vector<1x32xf32> to vector<8x32xf32>
    %159 = arith.addf %156, %158 : vector<8x32xf32>
    %160 = arith.addf %159, %145 : vector<8x32xf32>
    %cst_57 = arith.constant dense<0.000000e+00> : vector<8xf32>
    %161 = vector.multi_reduction <add>, %160, %cst_57 [1] : vector<8x32xf32> to vector<8xf32>
    %162 = vector.shape_cast %161 : vector<8xf32> to vector<8x1xf32>
    %cst_58 = arith.constant 3.200000e+01 : f32
    %163 = vector.broadcast %cst_58 : f32 to vector<8x1xf32>
    %164 = arith.divf %162, %163 : vector<8x1xf32>
    %165 = vector.broadcast %164 : vector<8x1xf32> to vector<8x32xf32>
    %166 = arith.subf %160, %165 : vector<8x32xf32>
    %167 = arith.mulf %166, %166 : vector<8x32xf32>
    %cst_59 = arith.constant dense<0.000000e+00> : vector<8xf32>
    %168 = vector.multi_reduction <add>, %167, %cst_59 [1] : vector<8x32xf32> to vector<8xf32>
    %169 = vector.shape_cast %168 : vector<8xf32> to vector<8x1xf32>
    %cst_60 = arith.constant 3.200000e+01 : f32
    %170 = vector.broadcast %cst_60 : f32 to vector<8x1xf32>
    %171 = arith.divf %169, %170 : vector<8x1xf32>
    %172 = vector.broadcast %164 : vector<8x1xf32> to vector<8x32xf32>
    %173 = arith.subf %160, %172 : vector<8x32xf32>
    %cst_61 = arith.constant 9.99999974E-6 : f32
    %174 = vector.broadcast %cst_61 : f32 to vector<8x1xf32>
    %175 = arith.addf %171, %174 : vector<8x1xf32>
    %176 = math.rsqrt %175 : vector<8x1xf32>
    %177 = vector.broadcast %176 : vector<8x1xf32> to vector<8x32xf32>
    %178 = arith.mulf %173, %177 : vector<8x32xf32>
    %179 = vector.extract_strided_slice %113 {offsets = [4, 0], sizes = [1, 32], strides = [1, 1]} : vector<6x32xf32> to vector<1x32xf32>
    %180 = vector.broadcast %179 : vector<1x32xf32> to vector<8x32xf32>
    %181 = arith.mulf %178, %180 : vector<8x32xf32>
    %182 = vector.extract_strided_slice %113 {offsets = [5, 0], sizes = [1, 32], strides = [1, 1]} : vector<6x32xf32> to vector<1x32xf32>
    %183 = vector.broadcast %182 : vector<1x32xf32> to vector<8x32xf32>
    %184 = arith.addf %181, %183 : vector<8x32xf32>
    %c0_62 = arith.constant 0 : index
    %c0_63 = arith.constant 0 : index
    %185 = vector.load %arg12[%c0_62, %c0_63] : memref<8x32xf32, #tpu.memory_space<vmem>>, vector<8x32xf32>
    tpu.vector_store %arg12[%c0_62, %c0_63], %184 {strides = array<i32>} : memref<8x32xf32, #tpu.memory_space<vmem>>, vector<8x32xf32>,
    return
  }
  func.func @transform_0(%arg0: i32) -> (i32, i32) {
    %c0_i32 = arith.constant 0 : i32
    %c0_i32_0 = arith.constant 0 : i32
    return %arg0, %c0_i32 : i32, i32
  }
  func.func @transform_1(%arg0: i32) -> (i32, i32) {
    %c0_i32 = arith.constant 0 : i32
    %c0_i32_0 = arith.constant 0 : i32
    return %arg0, %c0_i32 : i32, i32
  }
  func.func @transform_2(%arg0: i32) -> (i32, i32) {
    %c0_i32 = arith.constant 0 : i32
    %c0_i32_0 = arith.constant 0 : i32
    return %arg0, %c0_i32 : i32, i32
  }
  func.func @transform_3(%arg0: i32) -> (i32, i32) {
    %c0_i32 = arith.constant 0 : i32
    %c0_i32_0 = arith.constant 0 : i32
    %c0_i32_1 = arith.constant 0 : i32
    return %c0_i32, %c0_i32_0 : i32, i32
  }
  func.func @transform_4(%arg0: i32) -> (i32, i32) {
    %c0_i32 = arith.constant 0 : i32
    %c0_i32_0 = arith.constant 0 : i32
    %c0_i32_1 = arith.constant 0 : i32
    return %c0_i32, %c0_i32_0 : i32, i32
  }
  func.func @transform_5(%arg0: i32) -> (i32, i32) {
    %c0_i32 = arith.constant 0 : i32
    %c0_i32_0 = arith.constant 0 : i32
    %c0_i32_1 = arith.constant 0 : i32
    return %c0_i32, %c0_i32_0 : i32, i32
  }
  func.func @transform_6(%arg0: i32) -> (i32, i32) {
    %c0_i32 = arith.constant 0 : i32
    %c0_i32_0 = arith.constant 0 : i32
    %c0_i32_1 = arith.constant 0 : i32
    return %c0_i32, %c0_i32_0 : i32, i32
  }
  func.func @transform_7(%arg0: i32) -> (i32, i32) {
    %c0_i32 = arith.constant 0 : i32
    %c0_i32_0 = arith.constant 0 : i32
    %c0_i32_1 = arith.constant 0 : i32
    return %c0_i32, %c0_i32_0 : i32, i32
  }
  func.func @transform_8(%arg0: i32) -> (i32, i32) {
    %c0_i32 = arith.constant 0 : i32
    %c0_i32_0 = arith.constant 0 : i32
    %c0_i32_1 = arith.constant 0 : i32
    return %c0_i32, %c0_i32_0 : i32, i32
  }
  func.func @transform_9(%arg0: i32) -> (i32, i32) {
    %c0_i32 = arith.constant 0 : i32
    %c0_i32_0 = arith.constant 0 : i32
    %c0_i32_1 = arith.constant 0 : i32
    return %c0_i32, %c0_i32_0 : i32, i32
  }
  func.func @transform_10(%arg0: i32) -> (i32, i32) {
    %c0_i32 = arith.constant 0 : i32
    %c0_i32_0 = arith.constant 0 : i32
    %c0_i32_1 = arith.constant 0 : i32
    return %c0_i32, %c0_i32_0 : i32, i32
  }
  func.func @transform_11(%arg0: i32) -> (i32, i32) {
    %c0_i32 = arith.constant 0 : i32
    %c0_i32_0 = arith.constant 0 : i32
    return %arg0, %c0_i32 : i32, i32
  }
}

</mosaic_0001>

<llo_original>
// kernel: forward.1
$region0: #{forward.1}
  #allocation0 [shape = 'u32[]', space=smem, size = 0x4, offset = 0x4, fixed_abs, tag = 'smem constant byte address 0x4 - core index']
  #allocation1 [shape = 'u32[144,128]{1,0:T(1,128)}', space=vmem, size = 0x12000, scoped, tag = 'internal scratch']
  %s0 = inlined_call_operand.vmem [shape: f32[16,32], index: 0, kind: input, shape index: {}]
  %s1 = inlined_call_operand.vmem [shape: f32[16,32], index: 1, kind: input, shape index: {}]
  %s2 = inlined_call_operand.vmem [shape: f32[16,32], index: 2, kind: input, shape index: {}]
  %s3 = inlined_call_operand.vmem [shape: bf16[8,8], index: 3, kind: input, shape index: {}]
  %s4 = inlined_call_operand.vmem [shape: bf16[8,8], index: 4, kind: input, shape index: {}]
  %s5 = inlined_call_operand.vmem [shape: bf16[8,8], index: 5, kind: input, shape index: {}]
  %s6 = inlined_call_operand.vmem [shape: bf16[32,32], index: 6, kind: input, shape index: {}]
  %s7 = inlined_call_operand.vmem [shape: f32[6,32], index: 7, kind: input, shape index: {}]
  %s8 = inlined_call_operand.vmem [shape: bf16[32,64], index: 8, kind: input, shape index: {}]
  %s9 = inlined_call_operand.vmem [shape: f32[1,64], index: 9, kind: input, shape index: {}]
  %s10 = inlined_call_operand.vmem [shape: bf16[64,32], index: 10, kind: input, shape index: {}]
  %s11 = inlined_call_operand.hbm [shape: f32[16,32], index: 11, kind: output, shape index: {}]
  %s12 = sld [smem:[#allocation0]]
  $region77: #{forward.1} parent=0
    _
  %s14 = ssub.s32 1, %s12
  %s15 = scalar_select 0, %s14, %s12
  $region1: #{forward.1} parent=0
    #allocation2 [shape = 'u8[8192]{0}', space=vmem, size = 0x2000, scoped, tag = 'output window, operand 0']
    #allocation3 [shape = 's32[2]{0}', space=sflag, size = 0x8, scoped, tag = 'scoped memory for forward.1']
    %16 = vsyncpa [#allocation3], 0
    %s17 = scalar_lea.sflag [#allocation3], 1
    %18 = vsyncpa %s17, 0
    loop: start=0, step=1, limit=4
    $region2: #{forward.1} parent=1 // loop_pre_header
      _
    $region3: #{forward.1} parent=1 // loop_header
      %s20 = sphi 0, %s24
      %p21 = scmp.ge.s32.totalorder %s20, 4
      %s30 = sphi 0, %s32
      %s33 = sphi 0, %s30
      %s34 = sphi 0, %s33
      %s50 = sphi 0, %s34
      %s56 = sphi 0, %s58
      %s59 = sphi 0, %s56
      %s60 = sphi 0, %s59
      %s76 = sphi 0, %s60
      %s82 = sphi 0, %s84
      %s85 = sphi 0, %s82
      %s86 = sphi 0, %s85
      %s102 = sphi 0, %s86
      %s106 = sphi 0, %s106
      %s108 = sphi 0, %s106
      %s109 = sphi 0, %s108
      %s123 = sphi 0, %s109
      %s127 = sphi 0, %s127
      %s129 = sphi 0, %s127
      %s130 = sphi 0, %s129
      %s144 = sphi 0, %s130
      %s148 = sphi 0, %s148
      %s150 = sphi 0, %s148
      %s151 = sphi 0, %s150
      %s165 = sphi 0, %s151
      %s169 = sphi 0, %s169
      %s171 = sphi 0, %s169
      %s172 = sphi 0, %s171
      %s186 = sphi 0, %s172
      %s190 = sphi 0, %s190
      %s192 = sphi 0, %s190
      %s193 = sphi 0, %s192
      %s207 = sphi 0, %s193
      %s211 = sphi 0, %s211
      %s213 = sphi 0, %s211
      %s214 = sphi 0, %s213
      %s228 = sphi 0, %s214
      %s232 = sphi 0, %s232
      %s234 = sphi 0, %s232
      %s235 = sphi 0, %s234
      %s249 = sphi 0, %s235
      %s253 = sphi 0, %s253
      %s255 = sphi 0, %s253
      %s256 = sphi 0, %s255
      %s270 = sphi 0, %s256
      %s276 = sphi 0, %s278
      %s279 = sphi 0, %s276
      %s280 = sphi 0, %s279
      %s296 = sphi 0, %s280
    $region4: #{forward.1} parent=1 // loop_header_branch
      %23 = sbr.rel (%p21) target = $region8
    $region5: #{forward.1} parent=1 // loop_body
      %s25 = ssub.s32 %s20, 1
      %s26 = ssub.s32 %s20, 2
      %s27 = sadd.s32 %s20, 1
      %s28 = ssub.s32 %s20, %s27
      %p29 = scmp.eq.s32.totalorder %s28, 0
      %s31 = sadd.s32 %s30, 1
      %s32 = scalar_select %p29, %s30, %s31
      %p35 = pneg %p29
      %p36 = scmp.eq.s32.totalorder %s20, 1
      %p37 = por %p35, %p36
      %p38 = scmp.ne.s32.totalorder %s30, %s33
      %p39 = scmp.eq.s32.totalorder %s20, 0
      %p40 = por %p38, %p39
      %p41 = scmp.ne.s32.totalorder %s30, %s33
      %p42 = scmp.eq.s32.totalorder %s25, 1
      %p43 = por %p41, %p42
      %p44 = scmp.ne.s32.totalorder %s33, %s34
      %p45 = scmp.eq.s32.totalorder %s25, 0
      %p46 = por %p44, %p45
      %p47 = scmp.ne.s32.totalorder %s33, %s34
      %p48 = scmp.eq.s32.totalorder %s26, 1
      %p49 = por %p47, %p48
      %p51 = scmp.ne.s32.totalorder %s34, %s50
      %p52 = scmp.eq.s32.totalorder %s26, 0
      %p53 = por %p51, %p52
      %s54 = ssub.s32 %s20, %s27
      %p55 = scmp.eq.s32.totalorder %s54, 0
      %s57 = sadd.s32 %s56, 1
      %s58 = scalar_select %p55, %s56, %s57
      %p61 = pneg %p55
      %p62 = scmp.eq.s32.totalorder %s20, 1
      %p63 = por %p61, %p62
      %p64 = scmp.ne.s32.totalorder %s56, %s59
      %p65 = scmp.eq.s32.totalorder %s20, 0
      %p66 = por %p64, %p65
      %p67 = scmp.ne.s32.totalorder %s56, %s59
      %p68 = scmp.eq.s32.totalorder %s25, 1
      %p69 = por %p67, %p68
      %p70 = scmp.ne.s32.totalorder %s59, %s60
      %p71 = scmp.eq.s32.totalorder %s25, 0
      %p72 = por %p70, %p71
      %p73 = scmp.ne.s32.totalorder %s59, %s60
      %p74 = scmp.eq.s32.totalorder %s26, 1
      %p75 = por %p73, %p74
      %p77 = scmp.ne.s32.totalorder %s60, %s76
      %p78 = scmp.eq.s32.totalorder %s26, 0
      %p79 = por %p77, %p78
      %s80 = ssub.s32 %s20, %s27
      %p81 = scmp.eq.s32.totalorder %s80, 0
      %s83 = sadd.s32 %s82, 1
      %s84 = scalar_select %p81, %s82, %s83
      %p87 = pneg %p81
      %p88 = scmp.eq.s32.totalorder %s20, 1
      %p89 = por %p87, %p88
      %p90 = scmp.ne.s32.totalorder %s82, %s85
      %p91 = scmp.eq.s32.totalorder %s20, 0
      %p92 = por %p90, %p91
      %p93 = scmp.ne.s32.totalorder %s82, %s85
      %p94 = scmp.eq.s32.totalorder %s25, 1
      %p95 = por %p93, %p94
      %p96 = scmp.ne.s32.totalorder %s85, %s86
      %p97 = scmp.eq.s32.totalorder %s25, 0
      %p98 = por %p96, %p97
      %p99 = scmp.ne.s32.totalorder %s85, %s86
      %p100 = scmp.eq.s32.totalorder %s26, 1
      %p101 = por %p99, %p100
      %p103 = scmp.ne.s32.totalorder %s86, %s102
      %p104 = scmp.eq.s32.totalorder %s26, 0
      %p105 = por %p103, %p104
      %s107 = sadd.s32 %s106, 1
      %p110 = scmp.eq.s32.totalorder %s20, 1
      %p111 = scmp.ne.s32.totalorder %s106, %s108
      %p112 = scmp.eq.s32.totalorder %s20, 0
      %p113 = por %p111, %p112
      %p114 = scmp.ne.s32.totalorder %s106, %s108
      %p115 = scmp.eq.s32.totalorder %s25, 1
      %p116 = por %p114, %p115
      %p117 = scmp.ne.s32.totalorder %s108, %s109
      %p118 = scmp.eq.s32.totalorder %s25, 0
      %p119 = por %p117, %p118
      %p120 = scmp.ne.s32.totalorder %s108, %s109
      %p121 = scmp.eq.s32.totalorder %s26, 1
      %p122 = por %p120, %p121
      %p124 = scmp.ne.s32.totalorder %s109, %s123
      %p125 = scmp.eq.s32.totalorder %s26, 0
      %p126 = por %p124, %p125
      %s128 = sadd.s32 %s127, 1
      %p131 = scmp.eq.s32.totalorder %s20, 1
      %p132 = scmp.ne.s32.totalorder %s127, %s129
      %p133 = scmp.eq.s32.totalorder %s20, 0
      %p134 = por %p132, %p133
      %p135 = scmp.ne.s32.totalorder %s127, %s129
      %p136 = scmp.eq.s32.totalorder %s25, 1
      %p137 = por %p135, %p136
      %p138 = scmp.ne.s32.totalorder %s129, %s130
      %p139 = scmp.eq.s32.totalorder %s25, 0
      %p140 = por %p138, %p139
      %p141 = scmp.ne.s32.totalorder %s129, %s130
      %p142 = scmp.eq.s32.totalorder %s26, 1
      %p143 = por %p141, %p142
      %p145 = scmp.ne.s32.totalorder %s130, %s144
      %p146 = scmp.eq.s32.totalorder %s26, 0
      %p147 = por %p145, %p146
      %s149 = sadd.s32 %s148, 1
      %p152 = scmp.eq.s32.totalorder %s20, 1
      %p153 = scmp.ne.s32.totalorder %s148, %s150
      %p154 = scmp.eq.s32.totalorder %s20, 0
      %p155 = por %p153, %p154
      %p156 = scmp.ne.s32.totalorder %s148, %s150
      %p157 = scmp.eq.s32.totalorder %s25, 1
      %p158 = por %p156, %p157
      %p159 = scmp.ne.s32.totalorder %s150, %s151
      %p160 = scmp.eq.s32.totalorder %s25, 0
      %p161 = por %p159, %p160
      %p162 = scmp.ne.s32.totalorder %s150, %s151
      %p163 = scmp.eq.s32.totalorder %s26, 1
      %p164 = por %p162, %p163
      %p166 = scmp.ne.s32.totalorder %s151, %s165
      %p167 = scmp.eq.s32.totalorder %s26, 0
      %p168 = por %p166, %p167
      %s170 = sadd.s32 %s169, 1
      %p173 = scmp.eq.s32.totalorder %s20, 1
      %p174 = scmp.ne.s32.totalorder %s169, %s171
      %p175 = scmp.eq.s32.totalorder %s20, 0
      %p176 = por %p174, %p175
      %p177 = scmp.ne.s32.totalorder %s169, %s171
      %p178 = scmp.eq.s32.totalorder %s25, 1
      %p179 = por %p177, %p178
      %p180 = scmp.ne.s32.totalorder %s171, %s172
      %p181 = scmp.eq.s32.totalorder %s25, 0
      %p182 = por %p180, %p181
      %p183 = scmp.ne.s32.totalorder %s171, %s172
      %p184 = scmp.eq.s32.totalorder %s26, 1
      %p185 = por %p183, %p184
      %p187 = scmp.ne.s32.totalorder %s172, %s186
      %p188 = scmp.eq.s32.totalorder %s26, 0
      %p189 = por %p187, %p188
      %s191 = sadd.s32 %s190, 1
      %p194 = scmp.eq.s32.totalorder %s20, 1
      %p195 = scmp.ne.s32.totalorder %s190, %s192
      %p196 = scmp.eq.s32.totalorder %s20, 0
      %p197 = por %p195, %p196
      %p198 = scmp.ne.s32.totalorder %s190, %s192
      %p199 = scmp.eq.s32.totalorder %s25, 1
      %p200 = por %p198, %p199
      %p201 = scmp.ne.s32.totalorder %s192, %s193
      %p202 = scmp.eq.s32.totalorder %s25, 0
      %p203 = por %p201, %p202
      %p204 = scmp.ne.s32.totalorder %s192, %s193
      %p205 = scmp.eq.s32.totalorder %s26, 1
      %p206 = por %p204, %p205
      %p208 = scmp.ne.s32.totalorder %s193, %s207
      %p209 = scmp.eq.s32.totalorder %s26, 0
      %p210 = por %p208, %p209
      %s212 = sadd.s32 %s211, 1
      %p215 = scmp.eq.s32.totalorder %s20, 1
      %p216 = scmp.ne.s32.totalorder %s211, %s213
      %p217 = scmp.eq.s32.totalorder %s20, 0
      %p218 = por %p216, %p217
      %p219 = scmp.ne.s32.totalorder %s211, %s213
      %p220 = scmp.eq.s32.totalorder %s25, 1
      %p221 = por %p219, %p220
      %p222 = scmp.ne.s32.totalorder %s213, %s214
      %p223 = scmp.eq.s32.totalorder %s25, 0
      %p224 = por %p222, %p223
      %p225 = scmp.ne.s32.totalorder %s213, %s214
      %p226 = scmp.eq.s32.totalorder %s26, 1
      %p227 = por %p225, %p226
      %p229 = scmp.ne.s32.totalorder %s214, %s228
      %p230 = scmp.eq.s32.totalorder %s26, 0
      %p231 = por %p229, %p230
      %s233 = sadd.s32 %s232, 1
      %p236 = scmp.eq.s32.totalorder %s20, 1
      %p237 = scmp.ne.s32.totalorder %s232, %s234
      %p238 = scmp.eq.s32.totalorder %s20, 0
      %p239 = por %p237, %p238
      %p240 = scmp.ne.s32.totalorder %s232, %s234
      %p241 = scmp.eq.s32.totalorder %s25, 1
      %p242 = por %p240, %p241
      %p243 = scmp.ne.s32.totalorder %s234, %s235
      %p244 = scmp.eq.s32.totalorder %s25, 0
      %p245 = por %p243, %p244
      %p246 = scmp.ne.s32.totalorder %s234, %s235
      %p247 = scmp.eq.s32.totalorder %s26, 1
      %p248 = por %p246, %p247
      %p250 = scmp.ne.s32.totalorder %s235, %s249
      %p251 = scmp.eq.s32.totalorder %s26, 0
      %p252 = por %p250, %p251
      %s254 = sadd.s32 %s253, 1
      %p257 = scmp.eq.s32.totalorder %s20, 1
      %p258 = scmp.ne.s32.totalorder %s253, %s255
      %p259 = scmp.eq.s32.totalorder %s20, 0
      %p260 = por %p258, %p259
      %p261 = scmp.ne.s32.totalorder %s253, %s255
      %p262 = scmp.eq.s32.totalorder %s25, 1
      %p263 = por %p261, %p262
      %p264 = scmp.ne.s32.totalorder %s255, %s256
      %p265 = scmp.eq.s32.totalorder %s25, 0
      %p266 = por %p264, %p265
      %p267 = scmp.ne.s32.totalorder %s255, %s256
      %p268 = scmp.eq.s32.totalorder %s26, 1
      %p269 = por %p267, %p268
      %p271 = scmp.ne.s32.totalorder %s256, %s270
      %p272 = scmp.eq.s32.totalorder %s26, 0
      %p273 = por %p271, %p272
      %s274 = ssub.s32 %s20, %s27
      %p275 = scmp.eq.s32.totalorder %s274, 0
      %s277 = sadd.s32 %s276, 1
      %s278 = scalar_select %p275, %s276, %s277
      %p281 = pneg %p275
      %p282 = scmp.eq.s32.totalorder %s20, 1
      %p283 = por %p281, %p282
      %p284 = scmp.ne.s32.totalorder %s276, %s279
      %p285 = scmp.eq.s32.totalorder %s20, 0
      %p286 = por %p284, %p285
      %p287 = scmp.ne.s32.totalorder %s276, %s279
      %p288 = scmp.eq.s32.totalorder %s25, 1
      %p289 = por %p287, %p288
      %p290 = scmp.ne.s32.totalorder %s279, %s280
      %p291 = scmp.eq.s32.totalorder %s25, 0
      %p292 = por %p290, %p291
      %p293 = scmp.ne.s32.totalorder %s279, %s280
      %p294 = scmp.eq.s32.totalorder %s26, 1
      %p295 = por %p293, %p294
      %p297 = scmp.ne.s32.totalorder %s280, %s296
      %p298 = scmp.eq.s32.totalorder %s26, 0
      %p299 = por %p297, %p298
      %p300 = scmp.le.s32.totalorder 1, %s20
      %p301 = scmp.lt.s32.totalorder %s20, 3
      %p302 = pnand %p300, %p301
      %p303 = pneg %p302
      // Predicated region
      $region9: #{forward.1} parent=5 // pred_check
        _
      $region10: #{forward.1} parent=5 // pred_check_branch
        %305 = sbr.rel (%p302) target = $region12
      $region11: #{forward.1} parent=5 // pred_region
        %s306 = ssub.s32 %s20, 1
        // Predicated region
        $region13: #{forward.1} parent=11 // pred_check
          %p307 = pneg %p119
        $region14: #{forward.1} parent=11 // pred_check_branch
          %309 = sbr.rel (%p307) target = $region16
        $region15: #{forward.1} parent=11 // pred_region
          _
        $region16: #{forward.1} parent=11 // pred_fallthru
          _
        // Predicated region
        $region17: #{forward.1} parent=11 // pred_check
          %p310 = pneg %p140
        $region18: #{forward.1} parent=11 // pred_check_branch
          %312 = sbr.rel (%p310) target = $region20
        $region19: #{forward.1} parent=11 // pred_region
          _
        $region20: #{forward.1} parent=11 // pred_fallthru
          _
        // Predicated region
        $region21: #{forward.1} parent=11 // pred_check
          %p313 = pneg %p161
        $region22: #{forward.1} parent=11 // pred_check_branch
          %315 = sbr.rel (%p313) target = $region24
        $region23: #{forward.1} parent=11 // pred_region
          _
        $region24: #{forward.1} parent=11 // pred_fallthru
          _
        // Predicated region
        $region25: #{forward.1} parent=11 // pred_check
          %p316 = pneg %p182
        $region26: #{forward.1} parent=11 // pred_check_branch
          %318 = sbr.rel (%p316) target = $region28
        $region27: #{forward.1} parent=11 // pred_region
          _
        $region28: #{forward.1} parent=11 // pred_fallthru
          _
        // Predicated region
        $region29: #{forward.1} parent=11 // pred_check
          %p319 = pneg %p203
        $region30: #{forward.1} parent=11 // pred_check_branch
          %321 = sbr.rel (%p319) target = $region32
        $region31: #{forward.1} parent=11 // pred_region
          _
        $region32: #{forward.1} parent=11 // pred_fallthru
          _
        // Predicated region
        $region33: #{forward.1} parent=11 // pred_check
          %p322 = pneg %p224
        $region34: #{forward.1} parent=11 // pred_check_branch
          %324 = sbr.rel (%p322) target = $region36
        $region35: #{forward.1} parent=11 // pred_region
          _
        $region36: #{forward.1} parent=11 // pred_fallthru
          _
        // Predicated region
        $region37: #{forward.1} parent=11 // pred_check
          %p325 = pneg %p245
        $region38: #{forward.1} parent=11 // pred_check_branch
          %327 = sbr.rel (%p325) target = $region40
        $region39: #{forward.1} parent=11 // pred_region
          _
        $region40: #{forward.1} parent=11 // pred_fallthru
          _
        // Predicated region
        $region41: #{forward.1} parent=11 // pred_check
          %p328 = pneg %p266
        $region42: #{forward.1} parent=11 // pred_check_branch
          %330 = sbr.rel (%p328) target = $region44
        $region43: #{forward.1} parent=11 // pred_region
          _
        $region44: #{forward.1} parent=11 // pred_fallthru
          _
      $region12: #{forward.1} parent=5 // pred_fallthru
        _
      %p331 = scmp.lt.s32.totalorder %s20, 2
      // Predicated region
      $region45: #{forward.1} parent=5 // pred_check
        %p332 = pneg %p331
      $region46: #{forward.1} parent=5 // pred_check_branch
        %334 = sbr.rel (%p332) target = $region48
      $region47: #{forward.1} parent=5 // pred_region
        // Predicated region
        $region49: #{forward.1} parent=47 // pred_check
          %p335 = pneg %p40
        $region50: #{forward.1} parent=47 // pred_check_branch
          %337 = sbr.rel (%p335) target = $region52
        $region51: #{forward.1} parent=47 // pred_region
          %p338 = scmp.lt.s32.totalorder %s20, 1
          %s339 = scalar_select %p338, %s20, 1
          %s340 = smul.addr %s339, 8
          %s341 = scalar_lea.vmem %s0, %s340
        $region52: #{forward.1} parent=47 // pred_fallthru
          _
        // Predicated region
        $region53: #{forward.1} parent=47 // pred_check
          %p342 = pneg %p66
        $region54: #{forward.1} parent=47 // pred_check_branch
          %344 = sbr.rel (%p342) target = $region56
        $region55: #{forward.1} parent=47 // pred_region
          %p345 = scmp.lt.s32.totalorder %s20, 1
          %s346 = scalar_select %p345, %s20, 1
          %s347 = smul.addr %s346, 8
          %s348 = scalar_lea.vmem %s1, %s347
        $region56: #{forward.1} parent=47 // pred_fallthru
          _
        // Predicated region
        $region57: #{forward.1} parent=47 // pred_check
          %p349 = pneg %p92
        $region58: #{forward.1} parent=47 // pred_check_branch
          %351 = sbr.rel (%p349) target = $region60
        $region59: #{forward.1} parent=47 // pred_region
          %p352 = scmp.lt.s32.totalorder %s20, 1
          %s353 = scalar_select %p352, %s20, 1
          %s354 = smul.addr %s353, 8
          %s355 = scalar_lea.vmem %s2, %s354
        $region60: #{forward.1} parent=47 // pred_fallthru
          _
      $region48: #{forward.1} parent=5 // pred_fallthru
        _
      %p356 = scmp.le.s32.totalorder 1, %s20
      %p357 = scmp.lt.s32.totalorder %s20, 3
      %p358 = pnand %p356, %p357
      %p359 = pneg %p358
      // Predicated region
      $region61: #{forward.1} parent=5 // pred_check
        _
      $region62: #{forward.1} parent=5 // pred_check_branch
        %361 = sbr.rel (%p358) target = $region64
      $region63: #{forward.1} parent=5 // pred_region
        %s362 = ssub.s32 %s20, 1
        %p363 = scmp.lt.s32.totalorder %s25, 1
        %s364 = scalar_select %p363, %s25, 1
        %s365 = smul.addr %s364, 8
        %s366 = scalar_lea.vmem %s0, %s365
        %p367 = pneg %p46
        %p368 = pneg %p43
        %p369 = scmp.lt.s32.totalorder %s25, 1
        %s370 = scalar_select %p369, %s25, 1
        %s371 = smul.addr %s370, 8
        %s372 = scalar_lea.vmem %s1, %s371
        %p373 = pneg %p72
        %p374 = pneg %p69
        %p375 = scmp.lt.s32.totalorder %s25, 1
        %s376 = scalar_select %p375, %s25, 1
        %s377 = smul.addr %s376, 8
        %s378 = scalar_lea.vmem %s2, %s377
        %p379 = pneg %p98
        %p380 = pneg %p95
        %p381 = pneg %p119
        %p382 = pneg %p116
        %p383 = pneg %p140
        %p384 = pneg %p137
        %p385 = pneg %p161
        %p386 = pneg %p158
        %p387 = pneg %p182
        %p388 = pneg %p179
        %p389 = pneg %p203
        %p390 = pneg %p200
        %p391 = pneg %p224
        %p392 = pneg %p221
        %p393 = pneg %p245
        %p394 = pneg %p242
        %p395 = pneg %p266
        %p396 = pneg %p263
        %p397 = pneg %p292
        %p398 = pneg %p289
        %s399 = sand.u32 %s279, 1
        %s400 = scalar_lea.sflag [#allocation3], %s399
        %s401 = sand.u32 %s279, 1
        %s402 = smul.addr %s401, 8
        %s403 = scalar_lea.vmem [#allocation2], %s402
        %p404 = scmp.lt.s32.totalorder %s25, 1
        %s405 = scalar_select %p404, %s25, 1
        %s406 = smul.addr %s405, 8
        %s407 = scalar_lea.vmem %s0, %s406
        %p408 = scmp.lt.s32.totalorder %s25, 1
        %s409 = scalar_select %p408, %s25, 1
        %s410 = smul.addr %s409, 8
        %s411 = scalar_lea.vmem %s1, %s410
        %p412 = scmp.lt.s32.totalorder %s25, 1
        %s413 = scalar_select %p412, %s25, 1
        %s414 = smul.addr %s413, 8
        %s415 = scalar_lea.vmem %s2, %s414
        %v417 = vld [vmem:[%s407] sm:$0xff]
        %v418 = vpack.c.bf16 %v417, %v417
        %v419 = vld [vmem:[%s411] sm:$0xff]
        %v420 = vpack.c.bf16 %v419, %v419
        %v421 = vld [vmem:[%s415] sm:$0xff]
        %v422 = vpack.c.bf16 %v421, %v421
        %v423 = vld [vmem:[%s3] sm:$0xf]
        %v424 = vld [vmem:[%s4] sm:$0xf]
        %v425 = vld [vmem:[%s5] sm:$0xf]
        %vm426 = vcmask 64512
        %v428 = vsel %vm426, %v418, 0
        %vm430 = vcmask 1043456
        %v432 = vsel %vm430, %v423, 0
        %434 = vmatprep.subr.bf16.mxu0 0
        %435 = vmatpush1.bf16.msra.mxu0 0
        %436 = vmatprep.subr.bf16.mxu0 0
        %437 = vmatpush1.bf16.msra.mxu0 0
        %438 = vmatprep.subr.bf16.mxu0 0
        %439 = vmatpush1.bf16.msra.mxu0 0
        %440 = vmatprep.subr.bf16.mxu0 0
        %441 = vmatpush1.bf16.msra.mxu0 0
        %442 = vmatprep.subr.bf16.mxu0 0
        %443 = vmatpush1.bf16.msra.mxu0 0
        %444 = vmatprep.subr.bf16.mxu0 0
        %445 = vmatpush1.bf16.msra.mxu0 0
        %446 = vmatprep.subr.bf16.mxu0 0
        %447 = vmatpush1.bf16.msra.mxu0 0
        %448 = vmatprep.subr.bf16.mxu0 0
        %449 = vmatpush1.bf16.msra.mxu0 %v432
        %450 = vmatprep.subr.bf16.mxu0 0
        %451 = vmatpush2.bf16.msra.mxu0 0
        %452 = vmatprep.subr.bf16.mxu0 0
        %453 = vmatpush2.bf16.msra.mxu0 0
        %454 = vmatprep.subr.bf16.mxu0 0
        %455 = vmatpush2.bf16.msra.mxu0 0
        %456 = vmatprep.subr.bf16.mxu0 0
        %457 = vmatpush2.bf16.msra.mxu0 0
        %458 = vmatprep.subr.bf16.mxu0 0
        %459 = vmatpush2.bf16.msra.mxu0 0
        %460 = vmatprep.subr.bf16.mxu0 0
        %461 = vmatpush2.bf16.msra.mxu0 0
        %462 = vmatprep.subr.bf16.mxu0 0
        %463 = vmatpush2.bf16.msra.mxu0 0
        %464 = vmatprep.subr.bf16.mxu0 0
        %465 = vmatpush2.bf16.msra.mxu0 0
        %466 = vmatprep.mubr.bf16.mxu0 0
        %467 = vmatmul.mubr.bf16.gmra.mxu0 %v428
        %v468 = vpop.f32.mrf.mxu0
        %v469 = vadd.f32 0.0, %v468
        %v470 = vpop.f32.mrf.mxu0
        %v471 = vpop.f32.mrf.mxu0
        %v472 = vpop.f32.mrf.mxu0
        %473 = vdwg.mxu0
        %v474 = vpack.c.bf16 %v469, %v469
        %v476 = vsel %vm426, %v420, 0
        %v479 = vsel %vm430, %v424, 0
        %481 = vmatprep.subr.bf16.mxu0 0
        %482 = vmatpush1.bf16.msra.mxu0 0
        %483 = vmatprep.subr.bf16.mxu0 0
        %484 = vmatpush1.bf16.msra.mxu0 0
        %485 = vmatprep.subr.bf16.mxu0 0
        %486 = vmatpush1.bf16.msra.mxu0 0
        %487 = vmatprep.subr.bf16.mxu0 0
        %488 = vmatpush1.bf16.msra.mxu0 0
        %489 = vmatprep.subr.bf16.mxu0 0
        %490 = vmatpush1.bf16.msra.mxu0 0
        %491 = vmatprep.subr.bf16.mxu0 0
        %492 = vmatpush1.bf16.msra.mxu0 0
        %493 = vmatprep.subr.bf16.mxu0 0
        %494 = vmatpush1.bf16.msra.mxu0 0
        %495 = vmatprep.subr.bf16.mxu0 0
        %496 = vmatpush1.bf16.msra.mxu0 %v479
        %497 = vmatprep.subr.bf16.mxu0 0
        %498 = vmatpush2.bf16.msra.mxu0 0
        %499 = vmatprep.subr.bf16.mxu0 0
        %500 = vmatpush2.bf16.msra.mxu0 0
        %501 = vmatprep.subr.bf16.mxu0 0
        %502 = vmatpush2.bf16.msra.mxu0 0
        %503 = vmatprep.subr.bf16.mxu0 0
        %504 = vmatpush2.bf16.msra.mxu0 0
        %505 = vmatprep.subr.bf16.mxu0 0
        %506 = vmatpush2.bf16.msra.mxu0 0
        %507 = vmatprep.subr.bf16.mxu0 0
        %508 = vmatpush2.bf16.msra.mxu0 0
        %509 = vmatprep.subr.bf16.mxu0 0
        %510 = vmatpush2.bf16.msra.mxu0 0
        %511 = vmatprep.subr.bf16.mxu0 0
        %512 = vmatpush2.bf16.msra.mxu0 0
        %513 = vmatprep.mubr.bf16.mxu0 0
        %514 = vmatmul.mubr.bf16.gmra.mxu0 %v476
        %v515 = vpop.f32.mrf.mxu0
        %v516 = vadd.f32 0.0, %v515
        %v517 = vpop.f32.mrf.mxu0
        %v518 = vpop.f32.mrf.mxu0
        %v519 = vpop.f32.mrf.mxu0
        %520 = vdwg.mxu0
        %v521 = vpack.c.bf16 %v516, %v516
        %v523 = vsel %vm426, %v422, 0
        %v526 = vsel %vm430, %v425, 0
        %528 = vmatprep.subr.bf16.mxu0 0
        %529 = vmatpush1.bf16.msra.mxu0 0
        %530 = vmatprep.subr.bf16.mxu0 0
        %531 = vmatpush1.bf16.msra.mxu0 0
        %532 = vmatprep.subr.bf16.mxu0 0
        %533 = vmatpush1.bf16.msra.mxu0 0
        %534 = vmatprep.subr.bf16.mxu0 0
        %535 = vmatpush1.bf16.msra.mxu0 0
        %536 = vmatprep.subr.bf16.mxu0 0
        %537 = vmatpush1.bf16.msra.mxu0 0
        %538 = vmatprep.subr.bf16.mxu0 0
        %539 = vmatpush1.bf16.msra.mxu0 0
        %540 = vmatprep.subr.bf16.mxu0 0
        %541 = vmatpush1.bf16.msra.mxu0 0
        %542 = vmatprep.subr.bf16.mxu0 0
        %543 = vmatpush1.bf16.msra.mxu0 %v526
        %544 = vmatprep.subr.bf16.mxu0 0
        %545 = vmatpush2.bf16.msra.mxu0 0
        %546 = vmatprep.subr.bf16.mxu0 0
        %547 = vmatpush2.bf16.msra.mxu0 0
        %548 = vmatprep.subr.bf16.mxu0 0
        %549 = vmatpush2.bf16.msra.mxu0 0
        %550 = vmatprep.subr.bf16.mxu0 0
        %551 = vmatpush2.bf16.msra.mxu0 0
        %552 = vmatprep.subr.bf16.mxu0 0
        %553 = vmatpush2.bf16.msra.mxu0 0
        %554 = vmatprep.subr.bf16.mxu0 0
        %555 = vmatpush2.bf16.msra.mxu0 0
        %556 = vmatprep.subr.bf16.mxu0 0
        %557 = vmatpush2.bf16.msra.mxu0 0
        %558 = vmatprep.subr.bf16.mxu0 0
        %559 = vmatpush2.bf16.msra.mxu0 0
        %560 = vmatprep.mubr.bf16.mxu0 0
        %561 = vmatmul.mubr.bf16.gmra.mxu0 %v523
        %v562 = vpop.f32.mrf.mxu0
        %v563 = vadd.f32 0.0, %v562
        %v564 = vpop.f32.mrf.mxu0
        %v565 = vpop.f32.mrf.mxu0
        %v566 = vpop.f32.mrf.mxu0
        %567 = vdwg.mxu0
        %v568 = vpack.c.bf16 %v563, %v563
        %v570 = vsel %vm426, %v474, 0
        %v573 = vsel %vm426, %v521, 0
        %575 = vmatprep.subr.bf16.mxu0 0
        %576 = vmatpush1.bf16.xpose.msra.mxu0 0
        %577 = vmatprep.subr.bf16.mxu0 0
        %578 = vmatpush1.bf16.xpose.msra.mxu0 0
        %579 = vmatprep.subr.bf16.mxu0 0
        %580 = vmatpush1.bf16.xpose.msra.mxu0 0
        %581 = vmatprep.subr.bf16.mxu0 0
        %582 = vmatpush1.bf16.xpose.msra.mxu0 0
        %583 = vmatprep.subr.bf16.mxu0 0
        %584 = vmatpush1.bf16.xpose.msra.mxu0 0
        %585 = vmatprep.subr.bf16.mxu0 0
        %586 = vmatpush1.bf16.xpose.msra.mxu0 0
        %587 = vmatprep.subr.bf16.mxu0 0
        %588 = vmatpush1.bf16.xpose.msra.mxu0 0
        %589 = vmatprep.subr.bf16.mxu0 0
        %590 = vmatpush1.bf16.xpose.msra.mxu0 %v573
        %591 = vmatprep.subr.bf16.mxu0 0
        %592 = vmatpush2.bf16.xpose.msra.mxu0 0
        %593 = vmatprep.subr.bf16.mxu0 0
        %594 = vmatpush2.bf16.xpose.msra.mxu0 0
        %595 = vmatprep.subr.bf16.mxu0 0
        %596 = vmatpush2.bf16.xpose.msra.mxu0 0
        %597 = vmatprep.subr.bf16.mxu0 0
        %598 = vmatpush2.bf16.xpose.msra.mxu0 0
        %599 = vmatprep.subr.bf16.mxu0 0
        %600 = vmatpush2.bf16.xpose.msra.mxu0 0
        %601 = vmatprep.subr.bf16.mxu0 0
        %602 = vmatpush2.bf16.xpose.msra.mxu0 0
        %603 = vmatprep.subr.bf16.mxu0 0
        %604 = vmatpush2.bf16.xpose.msra.mxu0 0
        %605 = vmatprep.subr.bf16.mxu0 0
        %606 = vmatpush2.bf16.xpose.msra.mxu0 0
        %607 = vmatprep.mubr.bf16.mxu0 0
        %608 = vmatmul.mubr.bf16.gmra.mxu0 %v570
        %v609 = vpop.f32.mrf.mxu0
        %v610 = vadd.f32 0.0, %v609
        %v611 = vpop.f32.mrf.mxu0
        %v612 = vpop.f32.mrf.mxu0
        %v613 = vpop.f32.mrf.mxu0
        %614 = vdwg.mxu0
        %v615 = vsel %vm426, %v610, -inf
        %616 = vmax.xlane.f32.xlu0 %v615
        %v617 = vpop.xlane.xlu0 %616
        %v618 = vsub.f32 %v610, %v617
        %v619 = vmul.f32 %v618, 1.442695
        %v620 = vpow.pop %v619
        %v621 = vsel %vm426, %v620, 0.0
        %622 = vadd.xlane.f32.xlu0 %v621
        %v623 = vpop.xlane.xlu0 %622
        %v624 = vpack.c.bf16 %v620, %v620
        %v626 = vsel %vm426, %v624, 0
        %v629 = vsel %vm430, %v568, 0
        %631 = vmatprep.subr.bf16.mxu0 0
        %632 = vmatpush1.bf16.msra.mxu0 0
        %633 = vmatprep.subr.bf16.mxu0 0
        %634 = vmatpush1.bf16.msra.mxu0 0
        %635 = vmatprep.subr.bf16.mxu0 0
        %636 = vmatpush1.bf16.msra.mxu0 0
        %637 = vmatprep.subr.bf16.mxu0 0
        %638 = vmatpush1.bf16.msra.mxu0 0
        %639 = vmatprep.subr.bf16.mxu0 0
        %640 = vmatpush1.bf16.msra.mxu0 0
        %641 = vmatprep.subr.bf16.mxu0 0
        %642 = vmatpush1.bf16.msra.mxu0 0
        %643 = vmatprep.subr.bf16.mxu0 0
        %644 = vmatpush1.bf16.msra.mxu0 0
        %645 = vmatprep.subr.bf16.mxu0 0
        %646 = vmatpush1.bf16.msra.mxu0 %v629
        %647 = vmatprep.subr.bf16.mxu0 0
        %648 = vmatpush2.bf16.msra.mxu0 0
        %649 = vmatprep.subr.bf16.mxu0 0
        %650 = vmatpush2.bf16.msra.mxu0 0
        %651 = vmatprep.subr.bf16.mxu0 0
        %652 = vmatpush2.bf16.msra.mxu0 0
        %653 = vmatprep.subr.bf16.mxu0 0
        %654 = vmatpush2.bf16.msra.mxu0 0
        %655 = vmatprep.subr.bf16.mxu0 0
        %656 = vmatpush2.bf16.msra.mxu0 0
        %657 = vmatprep.subr.bf16.mxu0 0
        %658 = vmatpush2.bf16.msra.mxu0 0
        %659 = vmatprep.subr.bf16.mxu0 0
        %660 = vmatpush2.bf16.msra.mxu0 0
        %661 = vmatprep.subr.bf16.mxu0 0
        %662 = vmatpush2.bf16.msra.mxu0 0
        %663 = vmatprep.mubr.bf16.mxu0 0
        %664 = vmatmul.mubr.bf16.gmra.mxu0 %v626
        %v665 = vpop.f32.mrf.mxu0
        %v666 = vadd.f32 0.0, %v665
        %v667 = vpop.f32.mrf.mxu0
        %v668 = vpop.f32.mrf.mxu0
        %v669 = vpop.f32.mrf.mxu0
        %670 = vdwg.mxu0
        %v671 = vrcp.pop %v623
        %v672 = vmul.f32 %v666, %v671
        %674 = vrot.lane.b32.xlu0 %v418, 120
        %v675 = vpop.permute.xlu0 %674
        %v677 = vsel %vm426, %v675, 0
        %679 = vmatprep.subr.bf16.mxu0 0
        %680 = vmatpush1.bf16.msra.mxu0 0
        %681 = vmatprep.subr.bf16.mxu0 0
        %682 = vmatpush1.bf16.msra.mxu0 0
        %683 = vmatprep.subr.bf16.mxu0 0
        %684 = vmatpush1.bf16.msra.mxu0 0
        %685 = vmatprep.subr.bf16.mxu0 0
        %686 = vmatpush1.bf16.msra.mxu0 0
        %687 = vmatprep.subr.bf16.mxu0 0
        %688 = vmatpush1.bf16.msra.mxu0 0
        %689 = vmatprep.subr.bf16.mxu0 0
        %690 = vmatpush1.bf16.msra.mxu0 0
        %691 = vmatprep.subr.bf16.mxu0 0
        %692 = vmatpush1.bf16.msra.mxu0 0
        %693 = vmatprep.subr.bf16.mxu0 0
        %694 = vmatpush1.bf16.msra.mxu0 %v432
        %695 = vmatprep.subr.bf16.mxu0 0
        %696 = vmatpush2.bf16.msra.mxu0 0
        %697 = vmatprep.subr.bf16.mxu0 0
        %698 = vmatpush2.bf16.msra.mxu0 0
        %699 = vmatprep.subr.bf16.mxu0 0
        %700 = vmatpush2.bf16.msra.mxu0 0
        %701 = vmatprep.subr.bf16.mxu0 0
        %702 = vmatpush2.bf16.msra.mxu0 0
        %703 = vmatprep.subr.bf16.mxu0 0
        %704 = vmatpush2.bf16.msra.mxu0 0
        %705 = vmatprep.subr.bf16.mxu0 0
        %706 = vmatpush2.bf16.msra.mxu0 0
        %707 = vmatprep.subr.bf16.mxu0 0
        %708 = vmatpush2.bf16.msra.mxu0 0
        %709 = vmatprep.subr.bf16.mxu0 0
        %710 = vmatpush2.bf16.msra.mxu0 0
        %711 = vmatprep.mubr.bf16.mxu0 0
        %712 = vmatmul.mubr.bf16.gmra.mxu0 %v677
        %v713 = vpop.f32.mrf.mxu0
        %v714 = vadd.f32 0.0, %v713
        %v715 = vpop.f32.mrf.mxu0
        %v716 = vpop.f32.mrf.mxu0
        %v717 = vpop.f32.mrf.mxu0
        %718 = vdwg.mxu0
        %v719 = vpack.c.bf16 %v714, %v714
        %721 = vrot.lane.b32.xlu0 %v420, 120
        %v722 = vpop.permute.xlu0 %721
        %v724 = vsel %vm426, %v722, 0
        %726 = vmatprep.subr.bf16.mxu0 0
        %727 = vmatpush1.bf16.msra.mxu0 0
        %728 = vmatprep.subr.bf16.mxu0 0
        %729 = vmatpush1.bf16.msra.mxu0 0
        %730 = vmatprep.subr.bf16.mxu0 0
        %731 = vmatpush1.bf16.msra.mxu0 0
        %732 = vmatprep.subr.bf16.mxu0 0
        %733 = vmatpush1.bf16.msra.mxu0 0
        %734 = vmatprep.subr.bf16.mxu0 0
        %735 = vmatpush1.bf16.msra.mxu0 0
        %736 = vmatprep.subr.bf16.mxu0 0
        %737 = vmatpush1.bf16.msra.mxu0 0
        %738 = vmatprep.subr.bf16.mxu0 0
        %739 = vmatpush1.bf16.msra.mxu0 0
        %740 = vmatprep.subr.bf16.mxu0 0
        %741 = vmatpush1.bf16.msra.mxu0 %v479
        %742 = vmatprep.subr.bf16.mxu0 0
        %743 = vmatpush2.bf16.msra.mxu0 0
        %744 = vmatprep.subr.bf16.mxu0 0
        %745 = vmatpush2.bf16.msra.mxu0 0
        %746 = vmatprep.subr.bf16.mxu0 0
        %747 = vmatpush2.bf16.msra.mxu0 0
        %748 = vmatprep.subr.bf16.mxu0 0
        %749 = vmatpush2.bf16.msra.mxu0 0
        %750 = vmatprep.subr.bf16.mxu0 0
        %751 = vmatpush2.bf16.msra.mxu0 0
        %752 = vmatprep.subr.bf16.mxu0 0
        %753 = vmatpush2.bf16.msra.mxu0 0
        %754 = vmatprep.subr.bf16.mxu0 0
        %755 = vmatpush2.bf16.msra.mxu0 0
        %756 = vmatprep.subr.bf16.mxu0 0
        %757 = vmatpush2.bf16.msra.mxu0 0
        %758 = vmatprep.mubr.bf16.mxu0 0
        %759 = vmatmul.mubr.bf16.gmra.mxu0 %v724
        %v760 = vpop.f32.mrf.mxu0
        %v761 = vadd.f32 0.0, %v760
        %v762 = vpop.f32.mrf.mxu0
        %v763 = vpop.f32.mrf.mxu0
        %v764 = vpop.f32.mrf.mxu0
        %765 = vdwg.mxu0
        %v766 = vpack.c.bf16 %v761, %v761
        %768 = vrot.lane.b32.xlu0 %v422, 120
        %v769 = vpop.permute.xlu0 %768
        %v771 = vsel %vm426, %v769, 0
        %773 = vmatprep.subr.bf16.mxu0 0
        %774 = vmatpush1.bf16.msra.mxu0 0
        %775 = vmatprep.subr.bf16.mxu0 0
        %776 = vmatpush1.bf16.msra.mxu0 0
        %777 = vmatprep.subr.bf16.mxu0 0
        %778 = vmatpush1.bf16.msra.mxu0 0
        %779 = vmatprep.subr.bf16.mxu0 0
        %780 = vmatpush1.bf16.msra.mxu0 0
        %781 = vmatprep.subr.bf16.mxu0 0
        %782 = vmatpush1.bf16.msra.mxu0 0
        %783 = vmatprep.subr.bf16.mxu0 0
        %784 = vmatpush1.bf16.msra.mxu0 0
        %785 = vmatprep.subr.bf16.mxu0 0
        %786 = vmatpush1.bf16.msra.mxu0 0
        %787 = vmatprep.subr.bf16.mxu0 0
        %788 = vmatpush1.bf16.msra.mxu0 %v526
        %789 = vmatprep.subr.bf16.mxu0 0
        %790 = vmatpush2.bf16.msra.mxu0 0
        %791 = vmatprep.subr.bf16.mxu0 0
        %792 = vmatpush2.bf16.msra.mxu0 0
        %793 = vmatprep.subr.bf16.mxu0 0
        %794 = vmatpush2.bf16.msra.mxu0 0
        %795 = vmatprep.subr.bf16.mxu0 0
        %796 = vmatpush2.bf16.msra.mxu0 0
        %797 = vmatprep.subr.bf16.mxu0 0
        %798 = vmatpush2.bf16.msra.mxu0 0
        %799 = vmatprep.subr.bf16.mxu0 0
        %800 = vmatpush2.bf16.msra.mxu0 0
        %801 = vmatprep.subr.bf16.mxu0 0
        %802 = vmatpush2.bf16.msra.mxu0 0
        %803 = vmatprep.subr.bf16.mxu0 0
        %804 = vmatpush2.bf16.msra.mxu0 0
        %805 = vmatprep.mubr.bf16.mxu0 0
        %806 = vmatmul.mubr.bf16.gmra.mxu0 %v771
        %v807 = vpop.f32.mrf.mxu0
        %v808 = vadd.f32 0.0, %v807
        %v809 = vpop.f32.mrf.mxu0
        %v810 = vpop.f32.mrf.mxu0
        %v811 = vpop.f32.mrf.mxu0
        %812 = vdwg.mxu0
        %v813 = vpack.c.bf16 %v808, %v808
        %v815 = vsel %vm426, %v719, 0
        %v818 = vsel %vm426, %v766, 0
        %820 = vmatprep.subr.bf16.mxu0 0
        %821 = vmatpush1.bf16.xpose.msra.mxu0 0
        %822 = vmatprep.subr.bf16.mxu0 0
        %823 = vmatpush1.bf16.xpose.msra.mxu0 0
        %824 = vmatprep.subr.bf16.mxu0 0
        %825 = vmatpush1.bf16.xpose.msra.mxu0 0
        %826 = vmatprep.subr.bf16.mxu0 0
        %827 = vmatpush1.bf16.xpose.msra.mxu0 0
        %828 = vmatprep.subr.bf16.mxu0 0
        %829 = vmatpush1.bf16.xpose.msra.mxu0 0
        %830 = vmatprep.subr.bf16.mxu0 0
        %831 = vmatpush1.bf16.xpose.msra.mxu0 0
        %832 = vmatprep.subr.bf16.mxu0 0
        %833 = vmatpush1.bf16.xpose.msra.mxu0 0
        %834 = vmatprep.subr.bf16.mxu0 0
        %835 = vmatpush1.bf16.xpose.msra.mxu0 %v818
        %836 = vmatprep.subr.bf16.mxu0 0
        %837 = vmatpush2.bf16.xpose.msra.mxu0 0
        %838 = vmatprep.subr.bf16.mxu0 0
        %839 = vmatpush2.bf16.xpose.msra.mxu0 0
        %840 = vmatprep.subr.bf16.mxu0 0
        %841 = vmatpush2.bf16.xpose.msra.mxu0 0
        %842 = vmatprep.subr.bf16.mxu0 0
        %843 = vmatpush2.bf16.xpose.msra.mxu0 0
        %844 = vmatprep.subr.bf16.mxu0 0
        %845 = vmatpush2.bf16.xpose.msra.mxu0 0
        %846 = vmatprep.subr.bf16.mxu0 0
        %847 = vmatpush2.bf16.xpose.msra.mxu0 0
        %848 = vmatprep.subr.bf16.mxu0 0
        %849 = vmatpush2.bf16.xpose.msra.mxu0 0
        %850 = vmatprep.subr.bf16.mxu0 0
        %851 = vmatpush2.bf16.xpose.msra.mxu0 0
        %852 = vmatprep.mubr.bf16.mxu0 0
        %853 = vmatmul.mubr.bf16.gmra.mxu0 %v815
        %v854 = vpop.f32.mrf.mxu0
        %v855 = vadd.f32 0.0, %v854
        %v856 = vpop.f32.mrf.mxu0
        %v857 = vpop.f32.mrf.mxu0
        %v858 = vpop.f32.mrf.mxu0
        %859 = vdwg.mxu0
        %v860 = vsel %vm426, %v855, -inf
        %861 = vmax.xlane.f32.xlu0 %v860
        %v862 = vpop.xlane.xlu0 %861
        %v863 = vsub.f32 %v855, %v862
        %v864 = vmul.f32 %v863, 1.442695
        %v865 = vpow.pop %v864
        %v866 = vsel %vm426, %v865, 0.0
        %867 = vadd.xlane.f32.xlu0 %v866
        %v868 = vpop.xlane.xlu0 %867
        %v869 = vpack.c.bf16 %v865, %v865
        %v871 = vsel %vm426, %v869, 0
        %v874 = vsel %vm430, %v813, 0
        %876 = vmatprep.subr.bf16.mxu0 0
        %877 = vmatpush1.bf16.msra.mxu0 0
        %878 = vmatprep.subr.bf16.mxu0 0
        %879 = vmatpush1.bf16.msra.mxu0 0
        %880 = vmatprep.subr.bf16.mxu0 0
        %881 = vmatpush1.bf16.msra.mxu0 0
        %882 = vmatprep.subr.bf16.mxu0 0
        %883 = vmatpush1.bf16.msra.mxu0 0
        %884 = vmatprep.subr.bf16.mxu0 0
        %885 = vmatpush1.bf16.msra.mxu0 0
        %886 = vmatprep.subr.bf16.mxu0 0
        %887 = vmatpush1.bf16.msra.mxu0 0
        %888 = vmatprep.subr.bf16.mxu0 0
        %889 = vmatpush1.bf16.msra.mxu0 0
        %890 = vmatprep.subr.bf16.mxu0 0
        %891 = vmatpush1.bf16.msra.mxu0 %v874
        %892 = vmatprep.subr.bf16.mxu0 0
        %893 = vmatpush2.bf16.msra.mxu0 0
        %894 = vmatprep.subr.bf16.mxu0 0
        %895 = vmatpush2.bf16.msra.mxu0 0
        %896 = vmatprep.subr.bf16.mxu0 0
        %897 = vmatpush2.bf16.msra.mxu0 0
        %898 = vmatprep.subr.bf16.mxu0 0
        %899 = vmatpush2.bf16.msra.mxu0 0
        %900 = vmatprep.subr.bf16.mxu0 0
        %901 = vmatpush2.bf16.msra.mxu0 0
        %902 = vmatprep.subr.bf16.mxu0 0
        %903 = vmatpush2.bf16.msra.mxu0 0
        %904 = vmatprep.subr.bf16.mxu0 0
        %905 = vmatpush2.bf16.msra.mxu0 0
        %906 = vmatprep.subr.bf16.mxu0 0
        %907 = vmatpush2.bf16.msra.mxu0 0
        %908 = vmatprep.mubr.bf16.mxu0 0
        %909 = vmatmul.mubr.bf16.gmra.mxu0 %v871
        %v910 = vpop.f32.mrf.mxu0
        %v911 = vadd.f32 0.0, %v910
        %v912 = vpop.f32.mrf.mxu0
        %v913 = vpop.f32.mrf.mxu0
        %v914 = vpop.f32.mrf.mxu0
        %915 = vdwg.mxu0
        %v916 = vrcp.pop %v868
        %v917 = vmul.f32 %v911, %v916
        %918 = vrot.lane.b32.xlu0 %v418, 112
        %v919 = vpop.permute.xlu0 %918
        %v921 = vsel %vm426, %v919, 0
        %923 = vmatprep.subr.bf16.mxu0 0
        %924 = vmatpush1.bf16.msra.mxu0 0
        %925 = vmatprep.subr.bf16.mxu0 0
        %926 = vmatpush1.bf16.msra.mxu0 0
        %927 = vmatprep.subr.bf16.mxu0 0
        %928 = vmatpush1.bf16.msra.mxu0 0
        %929 = vmatprep.subr.bf16.mxu0 0
        %930 = vmatpush1.bf16.msra.mxu0 0
        %931 = vmatprep.subr.bf16.mxu0 0
        %932 = vmatpush1.bf16.msra.mxu0 0
        %933 = vmatprep.subr.bf16.mxu0 0
        %934 = vmatpush1.bf16.msra.mxu0 0
        %935 = vmatprep.subr.bf16.mxu0 0
        %936 = vmatpush1.bf16.msra.mxu0 0
        %937 = vmatprep.subr.bf16.mxu0 0
        %938 = vmatpush1.bf16.msra.mxu0 %v432
        %939 = vmatprep.subr.bf16.mxu0 0
        %940 = vmatpush2.bf16.msra.mxu0 0
        %941 = vmatprep.subr.bf16.mxu0 0
        %942 = vmatpush2.bf16.msra.mxu0 0
        %943 = vmatprep.subr.bf16.mxu0 0
        %944 = vmatpush2.bf16.msra.mxu0 0
        %945 = vmatprep.subr.bf16.mxu0 0
        %946 = vmatpush2.bf16.msra.mxu0 0
        %947 = vmatprep.subr.bf16.mxu0 0
        %948 = vmatpush2.bf16.msra.mxu0 0
        %949 = vmatprep.subr.bf16.mxu0 0
        %950 = vmatpush2.bf16.msra.mxu0 0
        %951 = vmatprep.subr.bf16.mxu0 0
        %952 = vmatpush2.bf16.msra.mxu0 0
        %953 = vmatprep.subr.bf16.mxu0 0
        %954 = vmatpush2.bf16.msra.mxu0 0
        %955 = vmatprep.mubr.bf16.mxu0 0
        %956 = vmatmul.mubr.bf16.gmra.mxu0 %v921
        %v957 = vpop.f32.mrf.mxu0
        %v958 = vadd.f32 0.0, %v957
        %v959 = vpop.f32.mrf.mxu0
        %v960 = vpop.f32.mrf.mxu0
        %v961 = vpop.f32.mrf.mxu0
        %962 = vdwg.mxu0
        %v963 = vpack.c.bf16 %v958, %v958
        %964 = vrot.lane.b32.xlu0 %v420, 112
        %v965 = vpop.permute.xlu0 %964
        %v967 = vsel %vm426, %v965, 0
        %969 = vmatprep.subr.bf16.mxu0 0
        %970 = vmatpush1.bf16.msra.mxu0 0
        %971 = vmatprep.subr.bf16.mxu0 0
        %972 = vmatpush1.bf16.msra.mxu0 0
        %973 = vmatprep.subr.bf16.mxu0 0
        %974 = vmatpush1.bf16.msra.mxu0 0
        %975 = vmatprep.subr.bf16.mxu0 0
        %976 = vmatpush1.bf16.msra.mxu0 0
        %977 = vmatprep.subr.bf16.mxu0 0
        %978 = vmatpush1.bf16.msra.mxu0 0
        %979 = vmatprep.subr.bf16.mxu0 0
        %980 = vmatpush1.bf16.msra.mxu0 0
        %981 = vmatprep.subr.bf16.mxu0 0
        %982 = vmatpush1.bf16.msra.mxu0 0
        %983 = vmatprep.subr.bf16.mxu0 0
        %984 = vmatpush1.bf16.msra.mxu0 %v479
        %985 = vmatprep.subr.bf16.mxu0 0
        %986 = vmatpush2.bf16.msra.mxu0 0
        %987 = vmatprep.subr.bf16.mxu0 0
        %988 = vmatpush2.bf16.msra.mxu0 0
        %989 = vmatprep.subr.bf16.mxu0 0
        %990 = vmatpush2.bf16.msra.mxu0 0
        %991 = vmatprep.subr.bf16.mxu0 0
        %992 = vmatpush2.bf16.msra.mxu0 0
        %993 = vmatprep.subr.bf16.mxu0 0
        %994 = vmatpush2.bf16.msra.mxu0 0
        %995 = vmatprep.subr.bf16.mxu0 0
        %996 = vmatpush2.bf16.msra.mxu0 0
        %997 = vmatprep.subr.bf16.mxu0 0
        %998 = vmatpush2.bf16.msra.mxu0 0
        %999 = vmatprep.subr.bf16.mxu0 0
        %1000 = vmatpush2.bf16.msra.mxu0 0
        %1001 = vmatprep.mubr.bf16.mxu0 0
        %1002 = vmatmul.mubr.bf16.gmra.mxu0 %v967
        %v1003 = vpop.f32.mrf.mxu0
        %v1004 = vadd.f32 0.0, %v1003
        %v1005 = vpop.f32.mrf.mxu0
        %v1006 = vpop.f32.mrf.mxu0
        %v1007 = vpop.f32.mrf.mxu0
        %1008 = vdwg.mxu0
        %v1009 = vpack.c.bf16 %v1004, %v1004
        %1010 = vrot.lane.b32.xlu0 %v422, 112
        %v1011 = vpop.permute.xlu0 %1010
        %v1013 = vsel %vm426, %v1011, 0
        %1015 = vmatprep.subr.bf16.mxu0 0
        %1016 = vmatpush1.bf16.msra.mxu0 0
        %1017 = vmatprep.subr.bf16.mxu0 0
        %1018 = vmatpush1.bf16.msra.mxu0 0
        %1019 = vmatprep.subr.bf16.mxu0 0
        %1020 = vmatpush1.bf16.msra.mxu0 0
        %1021 = vmatprep.subr.bf16.mxu0 0
        %1022 = vmatpush1.bf16.msra.mxu0 0
        %1023 = vmatprep.subr.bf16.mxu0 0
        %1024 = vmatpush1.bf16.msra.mxu0 0
        %1025 = vmatprep.subr.bf16.mxu0 0
        %1026 = vmatpush1.bf16.msra.mxu0 0
        %1027 = vmatprep.subr.bf16.mxu0 0
        %1028 = vmatpush1.bf16.msra.mxu0 0
        %1029 = vmatprep.subr.bf16.mxu0 0
        %1030 = vmatpush1.bf16.msra.mxu0 %v526
        %1031 = vmatprep.subr.bf16.mxu0 0
        %1032 = vmatpush2.bf16.msra.mxu0 0
        %1033 = vmatprep.subr.bf16.mxu0 0
        %1034 = vmatpush2.bf16.msra.mxu0 0
        %1035 = vmatprep.subr.bf16.mxu0 0
        %1036 = vmatpush2.bf16.msra.mxu0 0
        %1037 = vmatprep.subr.bf16.mxu0 0
        %1038 = vmatpush2.bf16.msra.mxu0 0
        %1039 = vmatprep.subr.bf16.mxu0 0
        %1040 = vmatpush2.bf16.msra.mxu0 0
        %1041 = vmatprep.subr.bf16.mxu0 0
        %1042 = vmatpush2.bf16.msra.mxu0 0
        %1043 = vmatprep.subr.bf16.mxu0 0
        %1044 = vmatpush2.bf16.msra.mxu0 0
        %1045 = vmatprep.subr.bf16.mxu0 0
        %1046 = vmatpush2.bf16.msra.mxu0 0
        %1047 = vmatprep.mubr.bf16.mxu0 0
        %1048 = vmatmul.mubr.bf16.gmra.mxu0 %v1013
        %v1049 = vpop.f32.mrf.mxu0
        %v1050 = vadd.f32 0.0, %v1049
        %v1051 = vpop.f32.mrf.mxu0
        %v1052 = vpop.f32.mrf.mxu0
        %v1053 = vpop.f32.mrf.mxu0
        %1054 = vdwg.mxu0
        %v1055 = vpack.c.bf16 %v1050, %v1050
        %v1057 = vsel %vm426, %v963, 0
        %v1060 = vsel %vm426, %v1009, 0
        %1062 = vmatprep.subr.bf16.mxu0 0
        %1063 = vmatpush1.bf16.xpose.msra.mxu0 0
        %1064 = vmatprep.subr.bf16.mxu0 0
        %1065 = vmatpush1.bf16.xpose.msra.mxu0 0
        %1066 = vmatprep.subr.bf16.mxu0 0
        %1067 = vmatpush1.bf16.xpose.msra.mxu0 0
        %1068 = vmatprep.subr.bf16.mxu0 0
        %1069 = vmatpush1.bf16.xpose.msra.mxu0 0
        %1070 = vmatprep.subr.bf16.mxu0 0
        %1071 = vmatpush1.bf16.xpose.msra.mxu0 0
        %1072 = vmatprep.subr.bf16.mxu0 0
        %1073 = vmatpush1.bf16.xpose.msra.mxu0 0
        %1074 = vmatprep.subr.bf16.mxu0 0
        %1075 = vmatpush1.bf16.xpose.msra.mxu0 0
        %1076 = vmatprep.subr.bf16.mxu0 0
        %1077 = vmatpush1.bf16.xpose.msra.mxu0 %v1060
        %1078 = vmatprep.subr.bf16.mxu0 0
        %1079 = vmatpush2.bf16.xpose.msra.mxu0 0
        %1080 = vmatprep.subr.bf16.mxu0 0
        %1081 = vmatpush2.bf16.xpose.msra.mxu0 0
        %1082 = vmatprep.subr.bf16.mxu0 0
        %1083 = vmatpush2.bf16.xpose.msra.mxu0 0
        %1084 = vmatprep.subr.bf16.mxu0 0
        %1085 = vmatpush2.bf16.xpose.msra.mxu0 0
        %1086 = vmatprep.subr.bf16.mxu0 0
        %1087 = vmatpush2.bf16.xpose.msra.mxu0 0
        %1088 = vmatprep.subr.bf16.mxu0 0
        %1089 = vmatpush2.bf16.xpose.msra.mxu0 0
        %1090 = vmatprep.subr.bf16.mxu0 0
        %1091 = vmatpush2.bf16.xpose.msra.mxu0 0
        %1092 = vmatprep.subr.bf16.mxu0 0
        %1093 = vmatpush2.bf16.xpose.msra.mxu0 0
        %1094 = vmatprep.mubr.bf16.mxu0 0
        %1095 = vmatmul.mubr.bf16.gmra.mxu0 %v1057
        %v1096 = vpop.f32.mrf.mxu0
        %v1097 = vadd.f32 0.0, %v1096
        %v1098 = vpop.f32.mrf.mxu0
        %v1099 = vpop.f32.mrf.mxu0
        %v1100 = vpop.f32.mrf.mxu0
        %1101 = vdwg.mxu0
        %v1102 = vsel %vm426, %v1097, -inf
        %1103 = vmax.xlane.f32.xlu0 %v1102
        %v1104 = vpop.xlane.xlu0 %1103
        %v1105 = vsub.f32 %v1097, %v1104
        %v1106 = vmul.f32 %v1105, 1.442695
        %v1107 = vpow.pop %v1106
        %v1108 = vsel %vm426, %v1107, 0.0
        %1109 = vadd.xlane.f32.xlu0 %v1108
        %v1110 = vpop.xlane.xlu0 %1109
        %v1111 = vpack.c.bf16 %v1107, %v1107
        %v1113 = vsel %vm426, %v1111, 0
        %v1116 = vsel %vm430, %v1055, 0
        %1118 = vmatprep.subr.bf16.mxu0 0
        %1119 = vmatpush1.bf16.msra.mxu0 0
        %1120 = vmatprep.subr.bf16.mxu0 0
        %1121 = vmatpush1.bf16.msra.mxu0 0
        %1122 = vmatprep.subr.bf16.mxu0 0
        %1123 = vmatpush1.bf16.msra.mxu0 0
        %1124 = vmatprep.subr.bf16.mxu0 0
        %1125 = vmatpush1.bf16.msra.mxu0 0
        %1126 = vmatprep.subr.bf16.mxu0 0
        %1127 = vmatpush1.bf16.msra.mxu0 0
        %1128 = vmatprep.subr.bf16.mxu0 0
        %1129 = vmatpush1.bf16.msra.mxu0 0
        %1130 = vmatprep.subr.bf16.mxu0 0
        %1131 = vmatpush1.bf16.msra.mxu0 0
        %1132 = vmatprep.subr.bf16.mxu0 0
        %1133 = vmatpush1.bf16.msra.mxu0 %v1116
        %1134 = vmatprep.subr.bf16.mxu0 0
        %1135 = vmatpush2.bf16.msra.mxu0 0
        %1136 = vmatprep.subr.bf16.mxu0 0
        %1137 = vmatpush2.bf16.msra.mxu0 0
        %1138 = vmatprep.subr.bf16.mxu0 0
        %1139 = vmatpush2.bf16.msra.mxu0 0
        %1140 = vmatprep.subr.bf16.mxu0 0
        %1141 = vmatpush2.bf16.msra.mxu0 0
        %1142 = vmatprep.subr.bf16.mxu0 0
        %1143 = vmatpush2.bf16.msra.mxu0 0
        %1144 = vmatprep.subr.bf16.mxu0 0
        %1145 = vmatpush2.bf16.msra.mxu0 0
        %1146 = vmatprep.subr.bf16.mxu0 0
        %1147 = vmatpush2.bf16.msra.mxu0 0
        %1148 = vmatprep.subr.bf16.mxu0 0
        %1149 = vmatpush2.bf16.msra.mxu0 0
        %1150 = vmatprep.mubr.bf16.mxu0 0
        %1151 = vmatmul.mubr.bf16.gmra.mxu0 %v1113
        %v1152 = vpop.f32.mrf.mxu0
        %v1153 = vadd.f32 0.0, %v1152
        %v1154 = vpop.f32.mrf.mxu0
        %v1155 = vpop.f32.mrf.mxu0
        %v1156 = vpop.f32.mrf.mxu0
        %1157 = vdwg.mxu0
        %v1158 = vrcp.pop %v1110
        %v1159 = vmul.f32 %v1153, %v1158
        %1160 = vrot.lane.b32.xlu0 %v418, 104
        %v1161 = vpop.permute.xlu0 %1160
        %v1163 = vsel %vm426, %v1161, 0
        %1165 = vmatprep.subr.bf16.mxu0 0
        %1166 = vmatpush1.bf16.msra.mxu0 0
        %1167 = vmatprep.subr.bf16.mxu0 0
        %1168 = vmatpush1.bf16.msra.mxu0 0
        %1169 = vmatprep.subr.bf16.mxu0 0
        %1170 = vmatpush1.bf16.msra.mxu0 0
        %1171 = vmatprep.subr.bf16.mxu0 0
        %1172 = vmatpush1.bf16.msra.mxu0 0
        %1173 = vmatprep.subr.bf16.mxu0 0
        %1174 = vmatpush1.bf16.msra.mxu0 0
        %1175 = vmatprep.subr.bf16.mxu0 0
        %1176 = vmatpush1.bf16.msra.mxu0 0
        %1177 = vmatprep.subr.bf16.mxu0 0
        %1178 = vmatpush1.bf16.msra.mxu0 0
        %1179 = vmatprep.subr.bf16.mxu0 0
        %1180 = vmatpush1.bf16.msra.mxu0 %v432
        %1181 = vmatprep.subr.bf16.mxu0 0
        %1182 = vmatpush2.bf16.msra.mxu0 0
        %1183 = vmatprep.subr.bf16.mxu0 0
        %1184 = vmatpush2.bf16.msra.mxu0 0
        %1185 = vmatprep.subr.bf16.mxu0 0
        %1186 = vmatpush2.bf16.msra.mxu0 0
        %1187 = vmatprep.subr.bf16.mxu0 0
        %1188 = vmatpush2.bf16.msra.mxu0 0
        %1189 = vmatprep.subr.bf16.mxu0 0
        %1190 = vmatpush2.bf16.msra.mxu0 0
        %1191 = vmatprep.subr.bf16.mxu0 0
        %1192 = vmatpush2.bf16.msra.mxu0 0
        %1193 = vmatprep.subr.bf16.mxu0 0
        %1194 = vmatpush2.bf16.msra.mxu0 0
        %1195 = vmatprep.subr.bf16.mxu0 0
        %1196 = vmatpush2.bf16.msra.mxu0 0
        %1197 = vmatprep.mubr.bf16.mxu0 0
        %1198 = vmatmul.mubr.bf16.gmra.mxu0 %v1163
        %v1199 = vpop.f32.mrf.mxu0
        %v1200 = vadd.f32 0.0, %v1199
        %v1201 = vpop.f32.mrf.mxu0
        %v1202 = vpop.f32.mrf.mxu0
        %v1203 = vpop.f32.mrf.mxu0
        %1204 = vdwg.mxu0
        %v1205 = vpack.c.bf16 %v1200, %v1200
        %1206 = vrot.lane.b32.xlu0 %v420, 104
        %v1207 = vpop.permute.xlu0 %1206
        %v1209 = vsel %vm426, %v1207, 0
        %1211 = vmatprep.subr.bf16.mxu0 0
        %1212 = vmatpush1.bf16.msra.mxu0 0
        %1213 = vmatprep.subr.bf16.mxu0 0
        %1214 = vmatpush1.bf16.msra.mxu0 0
        %1215 = vmatprep.subr.bf16.mxu0 0
        %1216 = vmatpush1.bf16.msra.mxu0 0
        %1217 = vmatprep.subr.bf16.mxu0 0
        %1218 = vmatpush1.bf16.msra.mxu0 0
        %1219 = vmatprep.subr.bf16.mxu0 0
        %1220 = vmatpush1.bf16.msra.mxu0 0
        %1221 = vmatprep.subr.bf16.mxu0 0
        %1222 = vmatpush1.bf16.msra.mxu0 0
        %1223 = vmatprep.subr.bf16.mxu0 0
        %1224 = vmatpush1.bf16.msra.mxu0 0
        %1225 = vmatprep.subr.bf16.mxu0 0
        %1226 = vmatpush1.bf16.msra.mxu0 %v479
        %1227 = vmatprep.subr.bf16.mxu0 0
        %1228 = vmatpush2.bf16.msra.mxu0 0
        %1229 = vmatprep.subr.bf16.mxu0 0
        %1230 = vmatpush2.bf16.msra.mxu0 0
        %1231 = vmatprep.subr.bf16.mxu0 0
        %1232 = vmatpush2.bf16.msra.mxu0 0
        %1233 = vmatprep.subr.bf16.mxu0 0
        %1234 = vmatpush2.bf16.msra.mxu0 0
        %1235 = vmatprep.subr.bf16.mxu0 0
        %1236 = vmatpush2.bf16.msra.mxu0 0
        %1237 = vmatprep.subr.bf16.mxu0 0
        %1238 = vmatpush2.bf16.msra.mxu0 0
        %1239 = vmatprep.subr.bf16.mxu0 0
        %1240 = vmatpush2.bf16.msra.mxu0 0
        %1241 = vmatprep.subr.bf16.mxu0 0
        %1242 = vmatpush2.bf16.msra.mxu0 0
        %1243 = vmatprep.mubr.bf16.mxu0 0
        %1244 = vmatmul.mubr.bf16.gmra.mxu0 %v1209
        %v1245 = vpop.f32.mrf.mxu0
        %v1246 = vadd.f32 0.0, %v1245
        %v1247 = vpop.f32.mrf.mxu0
        %v1248 = vpop.f32.mrf.mxu0
        %v1249 = vpop.f32.mrf.mxu0
        %1250 = vdwg.mxu0
        %v1251 = vpack.c.bf16 %v1246, %v1246
        %1252 = vrot.lane.b32.xlu0 %v422, 104
        %v1253 = vpop.permute.xlu0 %1252
        %v1255 = vsel %vm426, %v1253, 0
        %1257 = vmatprep.subr.bf16.mxu0 0
        %1258 = vmatpush1.bf16.msra.mxu0 0
        %1259 = vmatprep.subr.bf16.mxu0 0
        %1260 = vmatpush1.bf16.msra.mxu0 0
        %1261 = vmatprep.subr.bf16.mxu0 0
        %1262 = vmatpush1.bf16.msra.mxu0 0
        %1263 = vmatprep.subr.bf16.mxu0 0
        %1264 = vmatpush1.bf16.msra.mxu0 0
        %1265 = vmatprep.subr.bf16.mxu0 0
        %1266 = vmatpush1.bf16.msra.mxu0 0
        %1267 = vmatprep.subr.bf16.mxu0 0
        %1268 = vmatpush1.bf16.msra.mxu0 0
        %1269 = vmatprep.subr.bf16.mxu0 0
        %1270 = vmatpush1.bf16.msra.mxu0 0
        %1271 = vmatprep.subr.bf16.mxu0 0
        %1272 = vmatpush1.bf16.msra.mxu0 %v526
        %1273 = vmatprep.subr.bf16.mxu0 0
        %1274 = vmatpush2.bf16.msra.mxu0 0
        %1275 = vmatprep.subr.bf16.mxu0 0
        %1276 = vmatpush2.bf16.msra.mxu0 0
        %1277 = vmatprep.subr.bf16.mxu0 0
        %1278 = vmatpush2.bf16.msra.mxu0 0
        %1279 = vmatprep.subr.bf16.mxu0 0
        %1280 = vmatpush2.bf16.msra.mxu0 0
        %1281 = vmatprep.subr.bf16.mxu0 0
        %1282 = vmatpush2.bf16.msra.mxu0 0
        %1283 = vmatprep.subr.bf16.mxu0 0
        %1284 = vmatpush2.bf16.msra.mxu0 0
        %1285 = vmatprep.subr.bf16.mxu0 0
        %1286 = vmatpush2.bf16.msra.mxu0 0
        %1287 = vmatprep.subr.bf16.mxu0 0
        %1288 = vmatpush2.bf16.msra.mxu0 0
        %1289 = vmatprep.mubr.bf16.mxu0 0
        %1290 = vmatmul.mubr.bf16.gmra.mxu0 %v1255
        %v1291 = vpop.f32.mrf.mxu0
        %v1292 = vadd.f32 0.0, %v1291
        %v1293 = vpop.f32.mrf.mxu0
        %v1294 = vpop.f32.mrf.mxu0
        %v1295 = vpop.f32.mrf.mxu0
        %1296 = vdwg.mxu0
        %v1297 = vpack.c.bf16 %v1292, %v1292
        %v1299 = vsel %vm426, %v1205, 0
        %v1302 = vsel %vm426, %v1251, 0
        %1304 = vmatprep.subr.bf16.mxu0 0
        %1305 = vmatpush1.bf16.xpose.msra.mxu0 0
        %1306 = vmatprep.subr.bf16.mxu0 0
        %1307 = vmatpush1.bf16.xpose.msra.mxu0 0
        %1308 = vmatprep.subr.bf16.mxu0 0
        %1309 = vmatpush1.bf16.xpose.msra.mxu0 0
        %1310 = vmatprep.subr.bf16.mxu0 0
        %1311 = vmatpush1.bf16.xpose.msra.mxu0 0
        %1312 = vmatprep.subr.bf16.mxu0 0
        %1313 = vmatpush1.bf16.xpose.msra.mxu0 0
        %1314 = vmatprep.subr.bf16.mxu0 0
        %1315 = vmatpush1.bf16.xpose.msra.mxu0 0
        %1316 = vmatprep.subr.bf16.mxu0 0
        %1317 = vmatpush1.bf16.xpose.msra.mxu0 0
        %1318 = vmatprep.subr.bf16.mxu0 0
        %1319 = vmatpush1.bf16.xpose.msra.mxu0 %v1302
        %1320 = vmatprep.subr.bf16.mxu0 0
        %1321 = vmatpush2.bf16.xpose.msra.mxu0 0
        %1322 = vmatprep.subr.bf16.mxu0 0
        %1323 = vmatpush2.bf16.xpose.msra.mxu0 0
        %1324 = vmatprep.subr.bf16.mxu0 0
        %1325 = vmatpush2.bf16.xpose.msra.mxu0 0
        %1326 = vmatprep.subr.bf16.mxu0 0
        %1327 = vmatpush2.bf16.xpose.msra.mxu0 0
        %1328 = vmatprep.subr.bf16.mxu0 0
        %1329 = vmatpush2.bf16.xpose.msra.mxu0 0
        %1330 = vmatprep.subr.bf16.mxu0 0
        %1331 = vmatpush2.bf16.xpose.msra.mxu0 0
        %1332 = vmatprep.subr.bf16.mxu0 0
        %1333 = vmatpush2.bf16.xpose.msra.mxu0 0
        %1334 = vmatprep.subr.bf16.mxu0 0
        %1335 = vmatpush2.bf16.xpose.msra.mxu0 0
        %1336 = vmatprep.mubr.bf16.mxu0 0
        %1337 = vmatmul.mubr.bf16.gmra.mxu0 %v1299
        %v1338 = vpop.f32.mrf.mxu0
        %v1339 = vadd.f32 0.0, %v1338
        %v1340 = vpop.f32.mrf.mxu0
        %v1341 = vpop.f32.mrf.mxu0
        %v1342 = vpop.f32.mrf.mxu0
        %1343 = vdwg.mxu0
        %v1344 = vsel %vm426, %v1339, -inf
        %1345 = vmax.xlane.f32.xlu0 %v1344
        %v1346 = vpop.xlane.xlu0 %1345
        %v1347 = vsub.f32 %v1339, %v1346
        %v1348 = vmul.f32 %v1347, 1.442695
        %v1349 = vpow.pop %v1348
        %v1350 = vsel %vm426, %v1349, 0.0
        %1351 = vadd.xlane.f32.xlu0 %v1350
        %v1352 = vpop.xlane.xlu0 %1351
        %v1353 = vpack.c.bf16 %v1349, %v1349
        %v1355 = vsel %vm426, %v1353, 0
        %v1358 = vsel %vm430, %v1297, 0
        %1360 = vmatprep.subr.bf16.mxu0 0
        %1361 = vmatpush1.bf16.msra.mxu0 0
        %1362 = vmatprep.subr.bf16.mxu0 0
        %1363 = vmatpush1.bf16.msra.mxu0 0
        %1364 = vmatprep.subr.bf16.mxu0 0
        %1365 = vmatpush1.bf16.msra.mxu0 0
        %1366 = vmatprep.subr.bf16.mxu0 0
        %1367 = vmatpush1.bf16.msra.mxu0 0
        %1368 = vmatprep.subr.bf16.mxu0 0
        %1369 = vmatpush1.bf16.msra.mxu0 0
        %1370 = vmatprep.subr.bf16.mxu0 0
        %1371 = vmatpush1.bf16.msra.mxu0 0
        %1372 = vmatprep.subr.bf16.mxu0 0
        %1373 = vmatpush1.bf16.msra.mxu0 0
        %1374 = vmatprep.subr.bf16.mxu0 0
        %1375 = vmatpush1.bf16.msra.mxu0 %v1358
        %1376 = vmatprep.subr.bf16.mxu0 0
        %1377 = vmatpush2.bf16.msra.mxu0 0
        %1378 = vmatprep.subr.bf16.mxu0 0
        %1379 = vmatpush2.bf16.msra.mxu0 0
        %1380 = vmatprep.subr.bf16.mxu0 0
        %1381 = vmatpush2.bf16.msra.mxu0 0
        %1382 = vmatprep.subr.bf16.mxu0 0
        %1383 = vmatpush2.bf16.msra.mxu0 0
        %1384 = vmatprep.subr.bf16.mxu0 0
        %1385 = vmatpush2.bf16.msra.mxu0 0
        %1386 = vmatprep.subr.bf16.mxu0 0
        %1387 = vmatpush2.bf16.msra.mxu0 0
        %1388 = vmatprep.subr.bf16.mxu0 0
        %1389 = vmatpush2.bf16.msra.mxu0 0
        %1390 = vmatprep.subr.bf16.mxu0 0
        %1391 = vmatpush2.bf16.msra.mxu0 0
        %1392 = vmatprep.mubr.bf16.mxu0 0
        %1393 = vmatmul.mubr.bf16.gmra.mxu0 %v1355
        %v1394 = vpop.f32.mrf.mxu0
        %v1395 = vadd.f32 0.0, %v1394
        %v1396 = vpop.f32.mrf.mxu0
        %v1397 = vpop.f32.mrf.mxu0
        %v1398 = vpop.f32.mrf.mxu0
        %1399 = vdwg.mxu0
        %v1400 = vrcp.pop %v1352
        %v1401 = vmul.f32 %v1395, %v1400
        %v1402 = vld [vmem:[%s7] sm:$0x3f]
        %1404 = vrot.lane.b32.xlu0 %v917, 8
        %v1405 = vpop.permute.xlu0 %1404
        %1408 = vrot.lane.b32.xlu0 %v1159, 16
        %v1409 = vpop.permute.xlu0 %1408
        %1412 = vrot.lane.b32.xlu0 %v1401, 24
        %v1413 = vpop.permute.xlu0 %1412
        %v1415 = vsel %vm426, %v672, %v1405
        %vm1416 = vcmask 130048
        %v1417 = vsel %vm1416, %v1415, %v1409
        %vm1418 = vcmask 195584
        %v1419 = vsel %vm1418, %v1417, %v1413
        %v1420 = vpack.c.bf16 %v1419, %v1419
        %v1421 = vld [vmem:[%s6] sm:$0xf]
        %v1422 = vld [vmem:[%s6 + $0x4] sm:$0xf]
        %v1423 = vld [vmem:[%s6 + $0x8] sm:$0xf]
        %v1424 = vld [vmem:[%s6 + $0xc] sm:$0xf]
        %v1425 = vlaneseq
        %v1426 = vshrl.u32 %v1425, 7
        %v1427 = vsub.s32 0, %v1426
        %v1428 = vrot.slane %v1402, %v1427
        %v1433 = vunpack.c.l.b16 %v1421
        %v1434 = vunpack.c.l.b16 %v1422
        %v1435 = vunpack.c.l.b16 %v1423
        %v1436 = vunpack.c.l.b16 %v1424
        %v1437 = vpack.c.b16 %v1434, %v1433
        %v1438 = vpack.c.b16 %v1436, %v1435
        %vm1441 = vcmask 261120
        %v1443 = vsel %vm1441, %v1420, 0
        %1445 = vmatprep.subr.bf16.mxu0 0
        %1446 = vmatpush1.bf16.msra.mxu0 0
        %1447 = vmatprep.subr.bf16.mxu0 0
        %1448 = vmatpush1.bf16.msra.mxu0 0
        %1449 = vmatprep.subr.bf16.mxu0 0
        %1450 = vmatpush1.bf16.msra.mxu0 0
        %1451 = vmatprep.subr.bf16.mxu0 0
        %1452 = vmatpush1.bf16.msra.mxu0 0
        %1453 = vmatprep.subr.bf16.mxu0 0
        %1454 = vmatpush1.bf16.msra.mxu0 0
        %1455 = vmatprep.subr.bf16.mxu0 0
        %1456 = vmatpush1.bf16.msra.mxu0 0
        %1457 = vmatprep.subr.bf16.mxu0 0
        %1458 = vmatpush1.bf16.msra.mxu0 %v1438
        %1459 = vmatprep.subr.bf16.mxu0 0
        %1460 = vmatpush1.bf16.msra.mxu0 %v1437
        %1461 = vmatprep.subr.bf16.mxu0 0
        %1462 = vmatpush2.bf16.msra.mxu0 0
        %1463 = vmatprep.subr.bf16.mxu0 0
        %1464 = vmatpush2.bf16.msra.mxu0 0
        %1465 = vmatprep.subr.bf16.mxu0 0
        %1466 = vmatpush2.bf16.msra.mxu0 0
        %1467 = vmatprep.subr.bf16.mxu0 0
        %1468 = vmatpush2.bf16.msra.mxu0 0
        %1469 = vmatprep.subr.bf16.mxu0 0
        %1470 = vmatpush2.bf16.msra.mxu0 0
        %1471 = vmatprep.subr.bf16.mxu0 0
        %1472 = vmatpush2.bf16.msra.mxu0 0
        %1473 = vmatprep.subr.bf16.mxu0 0
        %1474 = vmatpush2.bf16.msra.mxu0 0
        %1475 = vmatprep.subr.bf16.mxu0 0
        %1476 = vmatpush2.bf16.msra.mxu0 0
        %1477 = vmatprep.mubr.bf16.mxu0 0
        %1478 = vmatmul.mubr.bf16.gmra.mxu0 %v1443
        %v1479 = vpop.f32.mrf.mxu0
        %v1480 = vadd.f32 %v1428, %v1479
        %v1481 = vpop.f32.mrf.mxu0
        %v1482 = vpop.f32.mrf.mxu0
        %v1483 = vpop.f32.mrf.mxu0
        %1484 = vdwg.mxu0
        %v1485 = vadd.f32 %v1480, %v417
        %v1486 = vsel %vm1441, %v1485, 0.0
        %1487 = vadd.xlane.f32.xlu0 %v1486
        %v1488 = vpop.xlane.xlu0 %1487
        %v1489 = vrcp.pop 32.0
        %v1490 = vmul.f32 %v1488, %v1489
        %v1491 = vsub.f32 %v1485, %v1490
        %v1492 = vmul.f32 %v1491, %v1491
        %v1493 = vsel %vm1441, %v1492, 0.0
        %1494 = vadd.xlane.f32.xlu0 %v1493
        %v1495 = vpop.xlane.xlu0 %1494
        %v1496 = vmul.f32 %v1495, %v1489
        %v1497 = vadd.f32 %v1496, 1e-05
        %v1498 = vrsqrt.pop %v1497
        %v1499 = vmul.f32 %v1491, %v1498
        %v1500 = vlaneseq
        %v1501 = vshrl.u32 %v1500, 7
        %v1502 = vsub.s32 1, %v1501
        %v1503 = vrot.slane %v1402, %v1502
        %v1504 = vmul.f32 %v1499, %v1503
        %v1505 = vlaneseq
        %v1506 = vshrl.u32 %v1505, 7
        %v1507 = vsub.s32 2, %v1506
        %v1508 = vrot.slane %v1402, %v1507
        %v1509 = vadd.f32 %v1504, %v1508
        %v1510 = vpack.c.bf16 %v1509, %v1509
        %v1511 = vld [vmem:[%s8] sm:$0xf]
        %v1512 = vld [vmem:[%s8 + $0x4] sm:$0xf]
        %v1513 = vld [vmem:[%s8 + $0x8] sm:$0xf]
        %v1514 = vld [vmem:[%s8 + $0xc] sm:$0xf]
        %v1515 = vld [vmem:[%s9] sm:$0x1]
        %v1517 = vlaneseq
        %v1518 = vshrl.u32 %v1517, 7
        %v1519 = vsub.s32 0, %v1518
        %v1520 = vrot.slane %v1515, %v1519
        %v1526 = vunpack.c.l.b16 %v1511
        %v1527 = vunpack.c.l.b16 %v1512
        %v1528 = vunpack.c.l.b16 %v1513
        %v1529 = vunpack.c.l.b16 %v1514
        %v1530 = vpack.c.b16 %v1527, %v1526
        %v1531 = vpack.c.b16 %v1529, %v1528
        %v1535 = vsel %vm1441, %v1510, 0
        %1537 = vmatprep.subr.bf16.mxu0 0
        %1538 = vmatpush1.bf16.msra.mxu0 0
        %1539 = vmatprep.subr.bf16.mxu0 0
        %1540 = vmatpush1.bf16.msra.mxu0 0
        %1541 = vmatprep.subr.bf16.mxu0 0
        %1542 = vmatpush1.bf16.msra.mxu0 0
        %1543 = vmatprep.subr.bf16.mxu0 0
        %1544 = vmatpush1.bf16.msra.mxu0 0
        %1545 = vmatprep.subr.bf16.mxu0 0
        %1546 = vmatpush1.bf16.msra.mxu0 0
        %1547 = vmatprep.subr.bf16.mxu0 0
        %1548 = vmatpush1.bf16.msra.mxu0 0
        %1549 = vmatprep.subr.bf16.mxu0 0
        %1550 = vmatpush1.bf16.msra.mxu0 %v1531
        %1551 = vmatprep.subr.bf16.mxu0 0
        %1552 = vmatpush1.bf16.msra.mxu0 %v1530
        %1553 = vmatprep.subr.bf16.mxu0 0
        %1554 = vmatpush2.bf16.msra.mxu0 0
        %1555 = vmatprep.subr.bf16.mxu0 0
        %1556 = vmatpush2.bf16.msra.mxu0 0
        %1557 = vmatprep.subr.bf16.mxu0 0
        %1558 = vmatpush2.bf16.msra.mxu0 0
        %1559 = vmatprep.subr.bf16.mxu0 0
        %1560 = vmatpush2.bf16.msra.mxu0 0
        %1561 = vmatprep.subr.bf16.mxu0 0
        %1562 = vmatpush2.bf16.msra.mxu0 0
        %1563 = vmatprep.subr.bf16.mxu0 0
        %1564 = vmatpush2.bf16.msra.mxu0 0
        %1565 = vmatprep.subr.bf16.mxu0 0
        %1566 = vmatpush2.bf16.msra.mxu0 0
        %1567 = vmatprep.subr.bf16.mxu0 0
        %1568 = vmatpush2.bf16.msra.mxu0 0
        %1569 = vmatprep.mubr.bf16.mxu0 0
        %1570 = vmatmul.mubr.bf16.gmra.mxu0 %v1535
        %v1571 = vpop.f32.mrf.mxu0
        %v1572 = vadd.f32 %v1520, %v1571
        %v1573 = vpop.f32.mrf.mxu0
        %v1574 = vpop.f32.mrf.mxu0
        %v1575 = vpop.f32.mrf.mxu0
        %1576 = vdwg.mxu0
        %v1577 = vmax.f32 %v1572, 0.0
        %v1578 = vpack.c.bf16 %v1577, %v1577
        %v1579 = vld [vmem:[%s10] sm:$0xf]
        %v1580 = vld [vmem:[%s10 + $0x4] sm:$0xf]
        %v1581 = vld [vmem:[%s10 + $0x8] sm:$0xf]
        %v1582 = vld [vmem:[%s10 + $0xc] sm:$0xf]
        %v1583 = vld [vmem:[%s10 + $0x10] sm:$0xf]
        %v1584 = vld [vmem:[%s10 + $0x14] sm:$0xf]
        %v1585 = vld [vmem:[%s10 + $0x18] sm:$0xf]
        %v1586 = vld [vmem:[%s10 + $0x1c] sm:$0xf]
        %v1587 = vlaneseq
        %v1588 = vshrl.u32 %v1587, 7
        %v1589 = vsub.s32 3, %v1588
        %v1590 = vrot.slane %v1402, %v1589
        %v1599 = vunpack.c.l.b16 %v1579
        %v1600 = vunpack.c.l.b16 %v1580
        %v1601 = vunpack.c.l.b16 %v1581
        %v1602 = vunpack.c.l.b16 %v1582
        %v1603 = vunpack.c.l.b16 %v1583
        %v1604 = vunpack.c.l.b16 %v1584
        %v1605 = vunpack.c.l.b16 %v1585
        %v1606 = vunpack.c.l.b16 %v1586
        %v1607 = vpack.c.b16 %v1600, %v1599
        %v1608 = vpack.c.b16 %v1602, %v1601
        %v1609 = vpack.c.b16 %v1604, %v1603
        %v1610 = vpack.c.b16 %v1606, %v1605
        %vm1615 = vcmask 523264
        %v1617 = vsel %vm1615, %v1578, 0
        %1619 = vmatprep.subr.bf16.mxu0 0
        %1620 = vmatpush1.bf16.msra.mxu0 0
        %1621 = vmatprep.subr.bf16.mxu0 0
        %1622 = vmatpush1.bf16.msra.mxu0 0
        %1623 = vmatprep.subr.bf16.mxu0 0
        %1624 = vmatpush1.bf16.msra.mxu0 0
        %1625 = vmatprep.subr.bf16.mxu0 0
        %1626 = vmatpush1.bf16.msra.mxu0 0
        %1627 = vmatprep.subr.bf16.mxu0 0
        %1628 = vmatpush1.bf16.msra.mxu0 %v1610
        %1629 = vmatprep.subr.bf16.mxu0 0
        %1630 = vmatpush1.bf16.msra.mxu0 %v1609
        %1631 = vmatprep.subr.bf16.mxu0 0
        %1632 = vmatpush1.bf16.msra.mxu0 %v1608
        %1633 = vmatprep.subr.bf16.mxu0 0
        %1634 = vmatpush1.bf16.msra.mxu0 %v1607
        %1635 = vmatprep.subr.bf16.mxu0 0
        %1636 = vmatpush2.bf16.msra.mxu0 0
        %1637 = vmatprep.subr.bf16.mxu0 0
        %1638 = vmatpush2.bf16.msra.mxu0 0
        %1639 = vmatprep.subr.bf16.mxu0 0
        %1640 = vmatpush2.bf16.msra.mxu0 0
        %1641 = vmatprep.subr.bf16.mxu0 0
        %1642 = vmatpush2.bf16.msra.mxu0 0
        %1643 = vmatprep.subr.bf16.mxu0 0
        %1644 = vmatpush2.bf16.msra.mxu0 0
        %1645 = vmatprep.subr.bf16.mxu0 0
        %1646 = vmatpush2.bf16.msra.mxu0 0
        %1647 = vmatprep.subr.bf16.mxu0 0
        %1648 = vmatpush2.bf16.msra.mxu0 0
        %1649 = vmatprep.subr.bf16.mxu0 0
        %1650 = vmatpush2.bf16.msra.mxu0 0
        %1651 = vmatprep.mubr.bf16.mxu0 0
        %1652 = vmatmul.mubr.bf16.gmra.mxu0 %v1617
        %v1653 = vpop.f32.mrf.mxu0
        %v1654 = vadd.f32 %v1590, %v1653
        %v1655 = vpop.f32.mrf.mxu0
        %v1656 = vpop.f32.mrf.mxu0
        %v1657 = vpop.f32.mrf.mxu0
        %1658 = vdwg.mxu0
        %v1659 = vadd.f32 %v1654, %v1509
        %v1660 = vsel %vm1441, %v1659, 0.0
        %1661 = vadd.xlane.f32.xlu0 %v1660
        %v1662 = vpop.xlane.xlu0 %1661
        %v1663 = vmul.f32 %v1662, %v1489
        %v1664 = vsub.f32 %v1659, %v1663
        %v1665 = vmul.f32 %v1664, %v1664
        %v1666 = vsel %vm1441, %v1665, 0.0
        %1667 = vadd.xlane.f32.xlu0 %v1666
        %v1668 = vpop.xlane.xlu0 %1667
        %v1669 = vmul.f32 %v1668, %v1489
        %v1670 = vadd.f32 %v1669, 1e-05
        %v1671 = vrsqrt.pop %v1670
        %v1672 = vmul.f32 %v1664, %v1671
        %v1673 = vlaneseq
        %v1674 = vshrl.u32 %v1673, 7
        %v1675 = vsub.s32 4, %v1674
        %v1676 = vrot.slane %v1402, %v1675
        %v1677 = vmul.f32 %v1672, %v1676
        %v1678 = vlaneseq
        %v1679 = vshrl.u32 %v1678, 7
        %v1680 = vsub.s32 5, %v1679
        %v1681 = vrot.slane %v1402, %v1680
        %v1682 = vadd.f32 %v1677, %v1681
        %1683 = vst.msk [vmem:[%s403] sm:$0xff] %vm1441, %v1682
        %s1684 = sand.u32 %s279, 1
        %s1685 = scalar_lea.sflag [#allocation3], %s1684
        %s1686 = sand.u32 %s279, 1
        %s1687 = smul.addr %s1686, 8
        %s1688 = scalar_lea.vmem [#allocation2], %s1687
        // Predicated region
        $region65: #{forward.1} parent=63 // pred_check
          %p1689 = pneg %p289
        $region66: #{forward.1} parent=63 // pred_check_branch
          %1691 = sbr.rel (%p1689) target = $region68
        $region67: #{forward.1} parent=63 // pred_region
          %s1693 = ssub.s32 128, 128
          %1694 = vsyncadd %s1685, %s1693
          %s1695 = smul.addr %s25, 128
          %s1696 = scalar_lea.hbm %s11, %s1695
          %s1698 = sshll.u32 %s1688, 4
          %s1699 = int_to_ptr.vmem [resolvable:$true] %s1698
          %1701 = dma.vmem_to_hbm [thread:$0]  %s1699, 128, %s1696, %s1685
        $region68: #{forward.1} parent=63 // pred_fallthru
          _
      $region64: #{forward.1} parent=5 // pred_fallthru
        _
      %p1702 = scmp.le.s32.totalorder 2, %s20
      // Predicated region
      $region69: #{forward.1} parent=5 // pred_check
        %p1703 = pneg %p1702
      $region70: #{forward.1} parent=5 // pred_check_branch
        %1705 = sbr.rel (%p1703) target = $region72
      $region71: #{forward.1} parent=5 // pred_region
        %s1706 = ssub.s32 %s20, 2
        // Predicated region
        $region73: #{forward.1} parent=71 // pred_check
          %p1707 = pneg %p295
        $region74: #{forward.1} parent=71 // pred_check_branch
          %1709 = sbr.rel (%p1707) target = $region76
        $region75: #{forward.1} parent=71 // pred_region
          %s1710 = sand.u32 %s280, 1
          %s1711 = scalar_lea.sflag [#allocation3], %s1710
          %s1712 = sand.u32 %s280, 1
          %s1713 = smul.addr %s1712, 8
          %s1714 = scalar_lea.vmem [#allocation2], %s1713
          %1715 = dma.done %s1711, 128
        $region76: #{forward.1} parent=71 // pred_fallthru
          _
      $region72: #{forward.1} parent=5 // pred_fallthru
        _
    $region6: #{forward.1} parent=1 // loop_footer
      %s24 = sadd.s32 1, %s20
    $region7: #{forward.1} parent=1 // loop_footer_branch
      %19 = sbr.rel target = $region3
    $region8: #{forward.1} parent=1 // loop_exit
      _
    %1716 = vsyncpa [#allocation3], 1
    %s1717 = scalar_lea.sflag [#allocation3], 1
    %1718 = vsyncpa %s1717, 1

</llo_original>
